<compile_context>
chip_gen: v7x
topology: tpu7x:2x2x1
jax: 0.10.0
libtpu: 0.0.40
codegen_flags: <defaults>
</compile_context>

<pallas_src>
import jax
import jax.numpy as jnp
from jax.experimental import pallas as pl
from jax.experimental.pallas import tpu as pltpu


# ----------------------------------------------------------------------------
# Pallas kernel: fused trilinear-2x upsample + 3x3x3 conv (pad=1) + bias + ReLU
# ----------------------------------------------------------------------------
def upsample_conv_relu_kernel(x_ref, q_ref, uh3_ref, wf_ref, b_ref, o_ref):
    # x_ref  : (H, D*W*Cin)        bf16, one batch element; rows = H, lanes = (d, w, ci)
    # q_ref  : (D*W*Cin, Dt*4*WC)  bf16, depth-interp(+pad+clamp) matrix for this tile
    # uh3_ref: (3*Ho, H)           bf16, H-upsample(+pad) rows for the 3 kh taps
    # wf_ref : (3*4*WC, 2*Wo*Cout) bf16, conv weights with W-upsample/pad/kw + kd-select folded
    # b_ref  : (1, 2*Wo*Cout)      f32 bias tiled over (t, wo)
    # o_ref  : (Dt, 2, Ho, Wo*Cout) f32 output block (depth = 2*(d0+j)+t)
    Dt, _, Ho, WoCo = o_ref.shape
    P4 = q_ref.shape[1] // Dt            # 4 * W * Cin (= 128 here)

    # 1) Depth interpolation (incl. conv depth zero-pad and boundary clamp): one matmul.
    planes = jnp.dot(x_ref[...], q_ref[...],
                     preferred_element_type=jnp.float32)       # (H, Dt*4*WC)
    planes = planes.astype(jnp.bfloat16)

    # 2) H-axis 2x upsample + H zero-pad, all 3 kh taps at once: one small matmul.
    up = jnp.dot(uh3_ref[...], planes,
                 preferred_element_type=jnp.float32)           # (3*Ho, Dt*4*WC)
    up = up.astype(jnp.bfloat16)

    # 3) Build the lane-dense LHS: rows (j, ho), lanes (kh, plane, w, ci).
    #    Every slice is a full (Ho x 128)-aligned tile -> plain vreg copies.
    rows = []
    for j in range(Dt):
        lane0 = j * P4
        kh_blocks = [up[kh * Ho:(kh + 1) * Ho, lane0:lane0 + P4] for kh in range(3)]
        rows.append(jnp.concatenate(kh_blocks, axis=-1))       # (Ho, 3*4*WC)
    lhs = jnp.concatenate(rows, axis=0)                        # (Dt*Ho, 3*4*WC)

    # 4) Single big MXU contraction (K = 384, N = 2*WoCo = 256) + bias + ReLU.
    acc = jnp.dot(lhs, wf_ref[...],
                  preferred_element_type=jnp.float32)          # (Dt*Ho, 2*WoCo)
    acc = jnp.maximum(acc + b_ref[...], 0.0)

    # 5) Lane-dense store; t=0 / t=1 are 128-lane-aligned column halves.
    acc = acc.reshape(Dt, Ho, 2 * WoCo)
    o_ref[:, 0:1, :, :] = acc[:, :, :WoCo].reshape(Dt, 1, Ho, WoCo).astype(o_ref.dtype)
    o_ref[:, 1:2, :, :] = acc[:, :, WoCo:].reshape(Dt, 1, Ho, WoCo).astype(o_ref.dtype)


# ----------------------------------------------------------------------------
# Wrapper helpers (all constant matrices are built once, outside the kernel)
# ----------------------------------------------------------------------------
def _linear_upsample_matrix(s_in):
    """(2*s_in, s_in) 1-D linear 2x upsample, PyTorch align_corners=False semantics."""
    s_out = 2 * s_in
    src = (jnp.arange(s_out, dtype=jnp.float32) + 0.5) / 2.0 - 0.5
    src = jnp.clip(src, 0.0, None)                 # PyTorch clamps src >= 0
    i0 = jnp.clip(jnp.floor(src).astype(jnp.int32), 0, s_in - 1)
    i1 = jnp.clip(i0 + 1, 0, s_in - 1)
    w1 = src - i0.astype(jnp.float32)
    rows = jnp.arange(s_out)
    m = jnp.zeros((s_out, s_in), jnp.float32)
    m = m.at[rows, i0].add(1.0 - w1)
    m = m.at[rows, i1].add(w1)
    return m


def _padded_upsample_matrix(s_in):
    """Upsample matrix with the conv's zero-pad rows prepended/appended: (2*s_in+2, s_in)."""
    s_out = 2 * s_in
    m = _linear_upsample_matrix(s_in)
    return jnp.zeros((s_out + 2, s_in), jnp.float32).at[1:s_out + 1].set(m)


def _depth_interp_matrix(D, Dt, WC):
    """Q[tile, d*WC+wc, (j*4+p)*WC+wc]: folds the depth 2x upsample, the conv's depth
    zero-pad and the boundary clamp for the 4 up-depth planes (2d-1..2d+2) needed by
    each input-depth slice j of a tile."""
    n_tiles = D // Dt
    cp = _padded_upsample_matrix(D)                         # (2D+2, D); row u+1 = up-depth u
    tt = jnp.arange(n_tiles)[:, None, None]
    jj = jnp.arange(Dt)[None, :, None]
    pp = jnp.arange(4)[None, None, :]
    dep = cp[2 * (tt * Dt + jj) + pp]                       # (n_tiles, Dt, 4, D)
    dep = dep.reshape(n_tiles, Dt * 4, D)
    eye = jnp.eye(WC, dtype=jnp.float32)
    q = jnp.einsum('tkd,wv->tdwkv', dep, eye)               # (nt, D, WC, Dt*4, WC)
    return q.reshape(n_tiles, D * WC, Dt * 4 * WC)


def _folded_conv_weight(w_conv, W, Cin, Cout):
    """wf[(kh, p, w_in, ci), (t, wo, co)] with the W-upsample, W zero-pad, kw taps and
    the kd/t depth-tap selection (zero blocks where p - t not in [0, 3)) folded in."""
    Wo = 2 * W
    uwp = _padded_upsample_matrix(W)                                  # (Wo+2, W)
    u3 = jnp.stack([uwp[kw:kw + Wo] for kw in range(3)], axis=0)      # (3, Wo, W)
    a = jnp.transpose(w_conv.astype(jnp.float32), (2, 3, 4, 1, 0))    # (kd,kh,kw,ci,co)
    # base[kd, kh, w_in, ci, wo, co] = sum_kw a[kd,kh,kw,ci,co] * uwp[wo+kw, w_in]
    base = jnp.einsum('dhkic,kow->dhwioc', a, u3)                     # (3,3,W,Cin,Wo,Cout)
    wf = jnp.zeros((3, 4, W, Cin, 2, Wo, Cout), jnp.float32)
    for t in range(2):
        for kd in range(3):
            wf = wf.at[:, kd + t, :, :, t, :, :].set(base[kd])
    return wf.reshape(3 * 4 * W * Cin, 2 * Wo * Cout)


def upsampling_forward(x_ncdhw, w_conv, b_conv, *, depth_tile=4):
    """Upsampling.forward (normalization='none').

    x_ncdhw: (N, Cin, D, H, W); w_conv: (Cout, Cin, 3, 3, 3); b_conv: (Cout,).
    Returns (N, Cout, 2D, 2H, 2W) float32.
    """
    N, Cin, D, H, W = x_ncdhw.shape
    Cout = w_conv.shape[0]
    Do, Ho, Wo = 2 * D, 2 * H, 2 * W
    WC = W * Cin
    DWC = D * WC
    WoCo = Wo * Cout
    K = 3 * 4 * WC

    Dt = min(depth_tile, D)
    while D % Dt:
        Dt -= 1
    n_tiles = D // Dt

    # Activations: NCDHW -> (N, H, D*W*Cin); rows = H, lanes = (d, w, ci); bf16 MXU input.
    x = jnp.transpose(x_ncdhw, (0, 3, 2, 4, 1)).reshape(N, H, DWC).astype(jnp.bfloat16)

    # Constant matrices (all entries 0 / 0.25 / 0.75 / 1.0 scaled -> exact-ish in bf16).
    q = _depth_interp_matrix(D, Dt, WC).astype(jnp.bfloat16)            # (nt, DWC, Dt*4*WC)
    uhp = _padded_upsample_matrix(H)                                    # (Ho+2, H)
    uh3 = jnp.concatenate([uhp[kh:kh + Ho] for kh in range(3)],
                          axis=0).astype(jnp.bfloat16)                  # (3*Ho, H)
    wf = _folded_conv_weight(w_conv, W, Cin, Cout).astype(jnp.bfloat16)  # (K, 2*WoCo)
    bias = jnp.tile(b_conv.astype(jnp.float32), 2 * Wo).reshape(1, 2 * WoCo)

    flops_per_step = 2 * (H * DWC * Dt * 4 * WC
                          + 3 * Ho * H * Dt * 4 * WC
                          + Dt * Ho * K * 2 * WoCo)
    bytes_accessed = int(2 * (x.size + q.size + uh3.size + wf.size)
                         + 4 * (bias.size + N * D * 2 * Ho * WoCo))

    out = pl.pallas_call(
        upsample_conv_relu_kernel,
        out_shape=jax.ShapeDtypeStruct((N, D, 2, Ho, WoCo), jnp.float32),
        grid=(N, n_tiles),
        in_specs=[
            pl.BlockSpec((None, H, DWC), lambda n, t: (n, 0, 0)),
            pl.BlockSpec((None, DWC, Dt * 4 * WC), lambda n, t: (t, 0, 0)),
            pl.BlockSpec((3 * Ho, H), lambda n, t: (0, 0)),
            pl.BlockSpec((K, 2 * WoCo), lambda n, t: (0, 0)),
            pl.BlockSpec((1, 2 * WoCo), lambda n, t: (0, 0)),
        ],
        out_specs=pl.BlockSpec((None, Dt, 2, Ho, WoCo), lambda n, t: (n, t, 0, 0, 0)),
        compiler_params=pltpu.CompilerParams(
            dimension_semantics=("parallel", "parallel"),
            vmem_limit_bytes=32 * 1024 * 1024,
        ),
        cost_estimate=pl.CostEstimate(
            flops=int(N * n_tiles * flops_per_step),
            transcendentals=0,
            bytes_accessed=bytes_accessed),
    )(x, q, uh3, wf, bias)

    # (N, D, 2, Ho, Wo*Cout) -> (N, Do, Ho, Wo, Cout) is a pure reshape; the only extra
    # HBM pass is the channels-last -> NCDHW transpose required by the module API.
    out = out.reshape(N, Do, Ho, Wo, Cout)
    return jnp.transpose(out, (0, 4, 1, 2, 3))


# ----------------------------------------------------------------------------
# Pure-JAX reference (matches PyTorch semantics) for the correctness check
# ----------------------------------------------------------------------------
def reference_forward(x_ncdhw, w_conv, b_conv):
    x = x_ncdhw.astype(jnp.float32)
    for axis in (2, 3, 4):                       # trilinear 2x, align_corners=False
        s_in = x.shape[axis]
        src = (jnp.arange(2 * s_in, dtype=jnp.float32) + 0.5) / 2.0 - 0.5
        src = jnp.clip(src, 0.0, None)
        i0 = jnp.clip(jnp.floor(src).astype(jnp.int32), 0, s_in - 1)
        i1 = jnp.clip(i0 + 1, 0, s_in - 1)
        w1 = src - i0.astype(jnp.float32)
        shape = [1] * x.ndim
        shape[axis] = -1
        x = (jnp.take(x, i0, axis=axis) * (1.0 - w1).reshape(shape)
             + jnp.take(x, i1, axis=axis) * w1.reshape(shape))
    out = jax.lax.conv_general_dilated(
        x, w_conv.astype(jnp.float32), window_strides=(1, 1, 1),
        padding=((1, 1), (1, 1), (1, 1)),
        dimension_numbers=('NCDHW', 'OIDHW', 'NCDHW'),
        precision=jax.lax.Precision.HIGHEST)
    out = out + b_conv.astype(jnp.float32).reshape(1, -1, 1, 1, 1)
    return jnp.maximum(out, 0.0)


if __name__ == "__main__":
    # Small shapes: batch=2, n_filters_in=4, n_filters_out=8, spatial=8 (-> 16 upsampled).
    N, Cin, Cout, D, H, W = 2, 4, 8, 8, 8, 8

    key = jax.random.PRNGKey(0)
    kx, kw, kb = jax.random.split(key, 3)
    x = jax.random.normal(kx, (N, Cin, D, H, W), dtype=jnp.float32)

    # Deterministic conv parameter init (PyTorch-like kaiming-uniform bounds).
    fan_in = Cin * 3 * 3 * 3
    bound = 1.0 / float(fan_in) ** 0.5
    w_conv = jax.random.uniform(kw, (Cout, Cin, 3, 3, 3), jnp.float32, -bound, bound)
    b_conv = jax.random.uniform(kb, (Cout,), jnp.float32, -bound, bound)

    out = jax.jit(upsampling_forward)(x, w_conv, b_conv)
    out = jax.block_until_ready(out)
    assert out.shape == (N, Cout, 2 * D, 2 * H, 2 * W)

    ref = jax.block_until_ready(reference_forward(x, w_conv, b_conv))
    max_err = float(jnp.max(jnp.abs(out - ref)))
    assert max_err < 2e-2, f"kernel/reference mismatch: max abs err = {max_err}"
    assert bool(jnp.all(out >= 0.0))   # ReLU
    print("KERNEL_OK")
</pallas_src>

<mosaic_0001>
module attributes {stable_mosaic.version = 11 : i64} {
  func.func private @main(%arg0: i32) attributes {dimension_semantics = [#tpu.dimension_semantics<core_parallel>], iteration_bounds = array<i64: 2>, tpu.core_type = #tpu.core_type<sc_scalar_subcore>, window_params = []} {
    return
  }
}

module attributes {stable_mosaic.version = 11 : i64} {
  func.func private @main(%arg0: i32) attributes {dimension_semantics = [#tpu.dimension_semantics<core_parallel>], iteration_bounds = array<i64: 2>, tpu.core_type = #tpu.core_type<sc_scalar_subcore>, window_params = []} {
    return
  }
}

module attributes {stable_mosaic.version = 11 : i64} {
  func.func @upsample_conv_relu_kernel(%arg0: i32, %arg1: i32, %arg2: memref<1x8x256xbf16, #tpu.memory_space<vmem>>, %arg3: memref<1x256x512xbf16, #tpu.memory_space<vmem>>, %arg4: memref<48x8xbf16, #tpu.memory_space<vmem>>, %arg5: memref<384x256xbf16, #tpu.memory_space<vmem>>, %arg6: memref<1x256xf32, #tpu.memory_space<vmem>>, %arg7: memref<1x4x2x16x128xf32, #tpu.memory_space<vmem>>) attributes {dimension_semantics = [#tpu.dimension_semantics<parallel>, #tpu.dimension_semantics<parallel>], iteration_bounds = array<i64: 2, 2>, scalar_prefetch = 0 : i64, scratch_operands = 0 : i64, tpu.core_type = #tpu.core_type<tc>, window_params = [{transform_indices = @transform_0, window_bounds = array<i64: 1, 8, 256>}, {transform_indices = @transform_1, window_bounds = array<i64: 1, 256, 512>}, {pipeline_mode = #tpu.pipeline_mode<synchronous>, transform_indices = @transform_2, window_bounds = array<i64: 48, 8>}, {pipeline_mode = #tpu.pipeline_mode<synchronous>, transform_indices = @transform_3, window_bounds = array<i64: 384, 256>}, {pipeline_mode = #tpu.pipeline_mode<synchronous>, transform_indices = @transform_4, window_bounds = array<i64: 1, 256>}, {transform_indices = @transform_5, window_bounds = array<i64: 1, 4, 2, 16, 128>}]} {
    %c0 = arith.constant 0 : index
    %c0_0 = arith.constant 0 : index
    %c0_1 = arith.constant 0 : index
    %0 = vector.load %arg2[%c0, %c0_0, %c0_1] : memref<1x8x256xbf16, #tpu.memory_space<vmem>>, vector<1x8x256xbf16>
    %1 = vector.shape_cast %0 : vector<1x8x256xbf16> to vector<8x256xbf16>
    %c0_2 = arith.constant 0 : index
    %c0_3 = arith.constant 0 : index
    %c0_4 = arith.constant 0 : index
    %2 = vector.load %arg3[%c0_2, %c0_3, %c0_4] : memref<1x256x512xbf16, #tpu.memory_space<vmem>>, vector<1x256x512xbf16>
    %3 = vector.shape_cast %2 : vector<1x256x512xbf16> to vector<256x512xbf16>
    %cst = arith.constant dense<0.000000e+00> : vector<8x512xf32>
    %4 = tpu.matmul %1, %3, %cst {dimension_numbers = #tpu.dot_dimension_numbers<[1], [0], [0], [1], [0, 0, 1, 1], [], []>} : vector<8x256xbf16>, vector<256x512xbf16>, vector<8x512xf32> -> vector<8x512xf32>
    %5 = arith.truncf %4 : vector<8x512xf32> to vector<8x512xbf16>
    %c0_5 = arith.constant 0 : index
    %c0_6 = arith.constant 0 : index
    %6 = vector.load %arg4[%c0_5, %c0_6] : memref<48x8xbf16, #tpu.memory_space<vmem>>, vector<48x8xbf16>
    %cst_7 = arith.constant dense<0.000000e+00> : vector<48x512xf32>
    %7 = tpu.matmul %6, %5, %cst_7 {dimension_numbers = #tpu.dot_dimension_numbers<[1], [0], [0], [1], [0, 0, 1, 1], [], []>} : vector<48x8xbf16>, vector<8x512xbf16>, vector<48x512xf32> -> vector<48x512xf32>
    %8 = arith.truncf %7 : vector<48x512xf32> to vector<48x512xbf16>
    %9 = vector.extract_strided_slice %8 {offsets = [0, 0], sizes = [16, 128], strides = [1, 1]} : vector<48x512xbf16> to vector<16x128xbf16>
    %10 = vector.extract_strided_slice %8 {offsets = [16, 0], sizes = [16, 128], strides = [1, 1]} : vector<48x512xbf16> to vector<16x128xbf16>
    %11 = vector.extract_strided_slice %8 {offsets = [32, 0], sizes = [16, 128], strides = [1, 1]} : vector<48x512xbf16> to vector<16x128xbf16>
    %12 = tpu.concatenate %9, %10, %11 in 1 : vector<16x128xbf16>, vector<16x128xbf16>, vector<16x128xbf16> -> vector<16x384xbf16>
    %13 = vector.extract_strided_slice %8 {offsets = [0, 128], sizes = [16, 128], strides = [1, 1]} : vector<48x512xbf16> to vector<16x128xbf16>
    %14 = vector.extract_strided_slice %8 {offsets = [16, 128], sizes = [16, 128], strides = [1, 1]} : vector<48x512xbf16> to vector<16x128xbf16>
    %15 = vector.extract_strided_slice %8 {offsets = [32, 128], sizes = [16, 128], strides = [1, 1]} : vector<48x512xbf16> to vector<16x128xbf16>
    %16 = tpu.concatenate %13, %14, %15 in 1 : vector<16x128xbf16>, vector<16x128xbf16>, vector<16x128xbf16> -> vector<16x384xbf16>
    %17 = vector.extract_strided_slice %8 {offsets = [0, 256], sizes = [16, 128], strides = [1, 1]} : vector<48x512xbf16> to vector<16x128xbf16>
    %18 = vector.extract_strided_slice %8 {offsets = [16, 256], sizes = [16, 128], strides = [1, 1]} : vector<48x512xbf16> to vector<16x128xbf16>
    %19 = vector.extract_strided_slice %8 {offsets = [32, 256], sizes = [16, 128], strides = [1, 1]} : vector<48x512xbf16> to vector<16x128xbf16>
    %20 = tpu.concatenate %17, %18, %19 in 1 : vector<16x128xbf16>, vector<16x128xbf16>, vector<16x128xbf16> -> vector<16x384xbf16>
    %21 = vector.extract_strided_slice %8 {offsets = [0, 384], sizes = [16, 128], strides = [1, 1]} : vector<48x512xbf16> to vector<16x128xbf16>
    %22 = vector.extract_strided_slice %8 {offsets = [16, 384], sizes = [16, 128], strides = [1, 1]} : vector<48x512xbf16> to vector<16x128xbf16>
    %23 = vector.extract_strided_slice %8 {offsets = [32, 384], sizes = [16, 128], strides = [1, 1]} : vector<48x512xbf16> to vector<16x128xbf16>
    %24 = tpu.concatenate %21, %22, %23 in 1 : vector<16x128xbf16>, vector<16x128xbf16>, vector<16x128xbf16> -> vector<16x384xbf16>
    %25 = tpu.concatenate %12, %16, %20, %24 in 0 : vector<16x384xbf16>, vector<16x384xbf16>, vector<16x384xbf16>, vector<16x384xbf16> -> vector<64x384xbf16>
    %c0_8 = arith.constant 0 : index
    %c0_9 = arith.constant 0 : index
    %26 = vector.load %arg5[%c0_8, %c0_9] : memref<384x256xbf16, #tpu.memory_space<vmem>>, vector<384x256xbf16>
    %cst_10 = arith.constant dense<0.000000e+00> : vector<64x256xf32>
    %27 = tpu.matmul %25, %26, %cst_10 {dimension_numbers = #tpu.dot_dimension_numbers<[1], [0], [0], [1], [0, 0, 1, 1], [], []>} : vector<64x384xbf16>, vector<384x256xbf16>, vector<64x256xf32> -> vector<64x256xf32>
    %c0_11 = arith.constant 0 : index
    %c0_12 = arith.constant 0 : index
    %28 = vector.load %arg6[%c0_11, %c0_12] : memref<1x256xf32, #tpu.memory_space<vmem>>, vector<1x256xf32>
    %29 = vector.broadcast %28 : vector<1x256xf32> to vector<64x256xf32>
    %30 = arith.addf %27, %29 : vector<64x256xf32>
    %cst_13 = arith.constant 0.000000e+00 : f32
    %31 = vector.broadcast %cst_13 : f32 to vector<64x256xf32>
    %32 = arith.maximumf %30, %31 : vector<64x256xf32>
    %33 = vector.shape_cast %32 : vector<64x256xf32> to vector<4x16x256xf32>
    %34 = vector.extract_strided_slice %33 {offsets = [0, 0, 0], sizes = [4, 16, 128], strides = [1, 1, 1]} : vector<4x16x256xf32> to vector<4x16x128xf32>
    %35 = vector.shape_cast %34 : vector<4x16x128xf32> to vector<4x1x16x128xf32>
    %c0_14 = arith.constant 0 : index
    %c0_15 = arith.constant 0 : index
    %c0_16 = arith.constant 0 : index
    %c0_17 = arith.constant 0 : index
    %c0_18 = arith.constant 0 : index
    %36 = vector.load %arg7[%c0_14, %c0_15, %c0_16, %c0_17, %c0_18] : memref<1x4x2x16x128xf32, #tpu.memory_space<vmem>>, vector<1x4x1x16x128xf32>
    %37 = vector.shape_cast %36 : vector<1x4x1x16x128xf32> to vector<4x1x16x128xf32>
    %38 = vector.shape_cast %35 : vector<4x1x16x128xf32> to vector<1x4x1x16x128xf32>
    tpu.vector_store %arg7[%c0_14, %c0_15, %c0_16, %c0_17, %c0_18], %38 {strides = array<i32>} : memref<1x4x2x16x128xf32, #tpu.memory_space<vmem>>, vector<1x4x1x16x128xf32>,
    %39 = vector.extract_strided_slice %33 {offsets = [0, 0, 128], sizes = [4, 16, 128], strides = [1, 1, 1]} : vector<4x16x256xf32> to vector<4x16x128xf32>
    %40 = vector.shape_cast %39 : vector<4x16x128xf32> to vector<4x1x16x128xf32>
    %c0_19 = arith.constant 0 : index
    %c0_20 = arith.constant 0 : index
    %c1 = arith.constant 1 : index
    %c0_21 = arith.constant 0 : index
    %c0_22 = arith.constant 0 : index
    %41 = vector.load %arg7[%c0_19, %c0_20, %c1, %c0_21, %c0_22] : memref<1x4x2x16x128xf32, #tpu.memory_space<vmem>>, vector<1x4x1x16x128xf32>
    %42 = vector.shape_cast %41 : vector<1x4x1x16x128xf32> to vector<4x1x16x128xf32>
    %43 = vector.shape_cast %40 : vector<4x1x16x128xf32> to vector<1x4x1x16x128xf32>
    tpu.vector_store %arg7[%c0_19, %c0_20, %c1, %c0_21, %c0_22], %43 {strides = array<i32>} : memref<1x4x2x16x128xf32, #tpu.memory_space<vmem>>, vector<1x4x1x16x128xf32>,
    return
  }
  func.func @transform_0(%arg0: i32, %arg1: i32) -> (i32, i32, i32) {
    %c0_i32 = arith.constant 0 : i32
    %c0_i32_0 = arith.constant 0 : i32
    %c0_i32_1 = arith.constant 0 : i32
    return %arg0, %c0_i32, %c0_i32_0 : i32, i32, i32
  }
  func.func @transform_1(%arg0: i32, %arg1: i32) -> (i32, i32, i32) {
    %c0_i32 = arith.constant 0 : i32
    %c0_i32_0 = arith.constant 0 : i32
    %c0_i32_1 = arith.constant 0 : i32
    return %arg1, %c0_i32, %c0_i32_0 : i32, i32, i32
  }
  func.func @transform_2(%arg0: i32, %arg1: i32) -> (i32, i32) {
    %c0_i32 = arith.constant 0 : i32
    %c0_i32_0 = arith.constant 0 : i32
    %c0_i32_1 = arith.constant 0 : i32
    return %c0_i32, %c0_i32_0 : i32, i32
  }
  func.func @transform_3(%arg0: i32, %arg1: i32) -> (i32, i32) {
    %c0_i32 = arith.constant 0 : i32
    %c0_i32_0 = arith.constant 0 : i32
    %c0_i32_1 = arith.constant 0 : i32
    return %c0_i32, %c0_i32_0 : i32, i32
  }
  func.func @transform_4(%arg0: i32, %arg1: i32) -> (i32, i32) {
    %c0_i32 = arith.constant 0 : i32
    %c0_i32_0 = arith.constant 0 : i32
    %c0_i32_1 = arith.constant 0 : i32
    return %c0_i32, %c0_i32_0 : i32, i32
  }
  func.func @transform_5(%arg0: i32, %arg1: i32) -> (i32, i32, i32, i32, i32) {
    %c0_i32 = arith.constant 0 : i32
    %c0_i32_0 = arith.constant 0 : i32
    %c0_i32_1 = arith.constant 0 : i32
    %c0_i32_2 = arith.constant 0 : i32
    return %arg0, %arg1, %c0_i32, %c0_i32_0, %c0_i32_1 : i32, i32, i32, i32, i32
  }
}

</mosaic_0001>

<llo_original>
// kernel: tile.8
$region0: #{tile.8}
  #allocation2 [shape = 's32[1]{0}', space=sflag, size = 0x4, scoped, tag = 'scoped memory for tile.8']
  %s0 = inlined_call_operand.hbm [shape: f32[8], index: 0, kind: input, shape index: {}]
  %s1 = inlined_call_operand.vmem [shape: f32[32,8], index: 1, kind: output, shape index: {}]
  $region1: #{tile.8} parent=0
    #allocation0 [shape = 'u8[512]{0}', space=vmem, size = 0x400, scoped, tag = 'operand span for operand 0']
    #allocation1 [shape = 's32[1]{0}', space=sflag, size = 0x4, scoped, tag = 'scoped memory for tile.8']
    %2 = vsyncpa [#allocation1], 0
    // Predicated region
    $region2: #{tile.8} parent=1 // pred_check
      _
    $region3: #{tile.8} parent=1 // pred_check_branch
      %4 = sbr.rel (0) target = $region5
    $region4: #{tile.8} parent=1 // pred_region
      %s6 = ssub.s32 16, 16
      %7 = vsyncadd [#allocation1], %s6
      %s9 = sshll.u32 [#allocation0], 4
      %s10 = int_to_ptr.vmem [resolvable:$true] %s9
      %12 = dma.hbm_to_vmem [thread:$0]  %s0, 16, %s10, [#allocation1]
    $region5: #{tile.8} parent=1 // pred_fallthru
      _
    // Predicated region
    $region6: #{tile.8} parent=1 // pred_check
      _
    $region7: #{tile.8} parent=1 // pred_check_branch
      %14 = sbr.rel (0) target = $region9
    $region8: #{tile.8} parent=1 // pred_region
      %15 = dma.done [#allocation1], 16
    $region9: #{tile.8} parent=1 // pred_fallthru
      _
    %v16 = vld [vmem:[#allocation0] ss:$0 sm:$0xff]
    %17 = vst [vmem:[%s1] sm:$0xff] %v16
    %s18 = scalar_lea.vmem %s1, 8
    %19 = vst [vmem:[%s18] sm:$0xff] %v16
    %s20 = scalar_lea.vmem %s1, 16
    %21 = vst [vmem:[%s20] sm:$0xff] %v16
    %s22 = scalar_lea.vmem %s1, 24
    %23 = vst [vmem:[%s22] sm:$0xff] %v16
    %24 = vsyncpa [#allocation1], 1

// kernel: tile.9
$region0: #{tile.9}
  %s0 = inlined_call_operand.vmem [shape: f32[32,8], index: 0, kind: input, shape index: {}]
  %s1 = inlined_call_operand.vmem [shape: f32[1,256], index: 1, kind: output, shape index: {}]
  $region1: #{tile.9} parent=0
    #allocation0 [shape = 'u8[8192]{0}', space=vmem, size = 0x2000, scoped, tag = 'scoped mem for output reshape']
    %s2 = smov 3
    %v3 = vld [vmem:[%s0] ss:$16 sm:%s2]
    %vm4 = vcmask 64512
    %5 = vst.msk [vmem:[#allocation0] ss:$8 sm:$0x3] %vm4, %v3
    %s6 = scalar_lea.vmem %s0, 15
    %s7 = smov 3
    %v8 = vld [vmem:[%s6] ss:$16 sm:%s7]
    %9 = vrot.lane.b32.xlu0 %v8, 120
    %v10 = vpop.permute.xlu0 %9
    %vm11 = vcmask 1048512
    %12 = vst.msk [vmem:[#allocation0] ss:$8 sm:$0x3] %vm11, %v10
    %s13 = scalar_lea.vmem %s0, 14
    %s14 = smov 3
    %v15 = vld [vmem:[%s13] ss:$16 sm:%s14]
    %16 = vrot.lane.b32.xlu0 %v15, 112
    %v17 = vpop.permute.xlu0 %16
    %vm18 = vcmask 982912
    %19 = vst.msk [vmem:[#allocation0] ss:$8 sm:$0x3] %vm18, %v17
    %s20 = scalar_lea.vmem %s0, 13
    %s21 = smov 3
    %v22 = vld [vmem:[%s20] ss:$16 sm:%s21]
    %23 = vrot.lane.b32.xlu0 %v22, 104
    %v24 = vpop.permute.xlu0 %23
    %vm25 = vcmask 917312
    %26 = vst.msk [vmem:[#allocation0] ss:$8 sm:$0x3] %vm25, %v24
    %s27 = scalar_lea.vmem %s0, 12
    %s28 = smov 3
    %v29 = vld [vmem:[%s27] ss:$16 sm:%s28]
    %30 = vrot.lane.b32.xlu0 %v29, 96
    %v31 = vpop.permute.xlu0 %30
    %vm32 = vcmask 851712
    %33 = vst.msk [vmem:[#allocation0] ss:$8 sm:$0x3] %vm32, %v31
    %s34 = scalar_lea.vmem %s0, 11
    %s35 = smov 3
    %v36 = vld [vmem:[%s34] ss:$16 sm:%s35]
    %37 = vrot.lane.b32.xlu0 %v36, 88
    %v38 = vpop.permute.xlu0 %37
    %vm39 = vcmask 786112
    %40 = vst.msk [vmem:[#allocation0] ss:$8 sm:$0x3] %vm39, %v38
    %s41 = scalar_lea.vmem %s0, 10
    %s42 = smov 3
    %v43 = vld [vmem:[%s41] ss:$16 sm:%s42]
    %44 = vrot.lane.b32.xlu0 %v43, 80
    %v45 = vpop.permute.xlu0 %44
    %vm46 = vcmask 720512
    %47 = vst.msk [vmem:[#allocation0] ss:$8 sm:$0x3] %vm46, %v45
    %s48 = scalar_lea.vmem %s0, 9
    %s49 = smov 3
    %v50 = vld [vmem:[%s48] ss:$16 sm:%s49]
    %51 = vrot.lane.b32.xlu0 %v50, 72
    %v52 = vpop.permute.xlu0 %51
    %vm53 = vcmask 654912
    %54 = vst.msk [vmem:[#allocation0] ss:$8 sm:$0x3] %vm53, %v52
    %s55 = scalar_lea.vmem %s0, 8
    %s56 = smov 3
    %v57 = vld [vmem:[%s55] ss:$16 sm:%s56]
    %58 = vrot.lane.b32.xlu0 %v57, 64
    %v59 = vpop.permute.xlu0 %58
    %vm60 = vcmask 589312
    %61 = vst.msk [vmem:[#allocation0] ss:$8 sm:$0x3] %vm60, %v59
    %s62 = scalar_lea.vmem %s0, 7
    %s63 = smov 3
    %v64 = vld [vmem:[%s62] ss:$16 sm:%s63]
    %65 = vrot.lane.b32.xlu0 %v64, 56
    %v66 = vpop.permute.xlu0 %65
    %vm67 = vcmask 523712
    %68 = vst.msk [vmem:[#allocation0] ss:$8 sm:$0x3] %vm67, %v66
    %s69 = scalar_lea.vmem %s0, 6
    %s70 = smov 3
    %v71 = vld [vmem:[%s69] ss:$16 sm:%s70]
    %72 = vrot.lane.b32.xlu0 %v71, 48
    %v73 = vpop.permute.xlu0 %72
    %vm74 = vcmask 458112
    %75 = vst.msk [vmem:[#allocation0] ss:$8 sm:$0x3] %vm74, %v73
    %s76 = scalar_lea.vmem %s0, 5
    %s77 = smov 3
    %v78 = vld [vmem:[%s76] ss:$16 sm:%s77]
    %79 = vrot.lane.b32.xlu0 %v78, 40
    %v80 = vpop.permute.xlu0 %79
    %vm81 = vcmask 392512
    %82 = vst.msk [vmem:[#allocation0] ss:$8 sm:$0x3] %vm81, %v80
    %s83 = scalar_lea.vmem %s0, 4
    %s84 = smov 3
    %v85 = vld [vmem:[%s83] ss:$16 sm:%s84]
    %86 = vrot.lane.b32.xlu0 %v85, 32
    %v87 = vpop.permute.xlu0 %86
    %vm88 = vcmask 326912
    %89 = vst.msk [vmem:[#allocation0] ss:$8 sm:$0x3] %vm88, %v87
    %s90 = scalar_lea.vmem %s0, 3
    %s91 = smov 3
    %v92 = vld [vmem:[%s90] ss:$16 sm:%s91]
    %93 = vrot.lane.b32.xlu0 %v92, 24
    %v94 = vpop.permute.xlu0 %93
    %vm95 = vcmask 261312
    %96 = vst.msk [vmem:[#allocation0] ss:$8 sm:$0x3] %vm95, %v94
    %s97 = scalar_lea.vmem %s0, 2
    %s98 = smov 3
    %v99 = vld [vmem:[%s97] ss:$16 sm:%s98]
    %100 = vrot.lane.b32.xlu0 %v99, 16
    %v101 = vpop.permute.xlu0 %100
    %vm102 = vcmask 195712
    %103 = vst.msk [vmem:[#allocation0] ss:$8 sm:$0x3] %vm102, %v101
    %s104 = scalar_lea.vmem %s0, 1
    %s105 = smov 3
    %v106 = vld [vmem:[%s104] ss:$16 sm:%s105]
    %107 = vrot.lane.b32.xlu0 %v106, 8
    %v108 = vpop.permute.xlu0 %107
    %vm109 = vcmask 130112
    %110 = vst.msk [vmem:[#allocation0] ss:$8 sm:$0x3] %vm109, %v108
    %s112 = sshllo.u32 0, 1
    %v114 = vld [vmem:[#allocation0] sm:%s112]
    %s115 = sshllo.u32 0, 1
    %116 = vst [vmem:[%s1] sm:%s115] %v114
    %s117 = scalar_lea.vmem [#allocation0], 8
    %v118 = vld [vmem:[%s117] sm:%s112]
    %s119 = sshllo.u32 0, 1
    %s120 = scalar_lea.vmem %s1, 1
    %121 = vst [vmem:[%s120] sm:%s119] %v118

// kernel: upsampling_forward.1
$region0: #{upsampling_forward.1}
  #allocation0 [shape = 'u32[]', space=smem, size = 0x4, offset = 0x4, fixed_abs, tag = 'smem constant byte address 0x4 - core index']
  #allocation1 [shape = 'u32[144,128]{1,0:T(1,128)}', space=vmem, size = 0x12000, scoped, tag = 'internal scratch']
  %s0 = inlined_call_operand.vmem [shape: bf16[2,8,256], index: 0, kind: input, shape index: {}]
  %s1 = inlined_call_operand.vmem [shape: bf16[2,256,512], index: 1, kind: input, shape index: {}]
  %s2 = inlined_call_operand.vmem [shape: bf16[48,8], index: 2, kind: input, shape index: {}]
  %s3 = inlined_call_operand.vmem [shape: bf16[384,256], index: 3, kind: input, shape index: {}]
  %s4 = inlined_call_operand.vmem [shape: f32[1,256], index: 4, kind: input, shape index: {}]
  %s5 = inlined_call_operand.vmem [shape: f32[2,8,2,16,128], index: 5, kind: output, shape index: {}]
  %s6 = sld [smem:[#allocation0]]
  $region53: #{upsampling_forward.1} parent=0
    _
  %s8 = ssub.s32 1, %s6
  %s9 = scalar_select 0, %s8, %s6
  loop: start=0, step=1, limit=6
  $region2: #{upsampling_forward.1} parent=0 // loop_pre_header
    _
  $region3: #{upsampling_forward.1} parent=0 // loop_header
    %s11 = sphi 0, %s15
    %p12 = scmp.ge.s32.totalorder %s11, 6
    %s18 = sphi 0, %s30
    %s19 = sphi 0, %s26
    %s20 = sphi 0, %s18
    %s21 = sphi 0, %s19
    %s22 = sphi 0, %s20
    %s23 = sphi 0, %s21
    %s33 = sphi 0, %s35
    %s36 = sphi 0, %s33
    %s37 = sphi 0, %s36
    %s53 = sphi 0, %s37
    %s59 = sphi 0, %s61
    %s62 = sphi 0, %s59
    %s63 = sphi 0, %s62
    %s79 = sphi 0, %s63
    %s83 = sphi 0, %s83
    %s85 = sphi 0, %s83
    %s86 = sphi 0, %s85
    %s100 = sphi 0, %s86
    %s104 = sphi 0, %s104
    %s106 = sphi 0, %s104
    %s107 = sphi 0, %s106
    %s121 = sphi 0, %s107
    %s125 = sphi 0, %s125
    %s127 = sphi 0, %s125
    %s128 = sphi 0, %s127
    %s142 = sphi 0, %s128
    %s150 = sphi 0, %s152
    %s153 = sphi 0, %s150
    %s154 = sphi 0, %s153
    %s170 = sphi 0, %s154
  $region4: #{upsampling_forward.1} parent=0 // loop_header_branch
    %14 = sbr.rel (%p12) target = $region8
  $region5: #{upsampling_forward.1} parent=0 // loop_body
    %s16 = ssub.s32 %s11, 1
    %s17 = ssub.s32 %s11, 2
    %s24 = sadd.s32 1, %s19
    %p25 = scmp.ge.s32.totalorder %s24, 2
    %s26 = scalar_select %p25, 0, %s24
    %s27 = sadd.s32 1, %s18
    %s28 = scalar_select %p25, %s27, %s18
    %p29 = scmp.ge.s32.totalorder %s28, 2
    %s30 = scalar_select %p29, 0, %s28
    %s31 = ssub.s32 %s18, %s30
    %p32 = scmp.eq.s32.totalorder %s31, 0
    %s34 = sadd.s32 %s33, 1
    %s35 = scalar_select %p32, %s33, %s34
    %p38 = pneg %p32
    %p39 = scmp.eq.s32.totalorder %s11, 3
    %p40 = por %p38, %p39
    %p41 = scmp.ne.s32.totalorder %s33, %s36
    %p42 = scmp.eq.s32.totalorder %s11, 0
    %p43 = por %p41, %p42
    %p44 = scmp.ne.s32.totalorder %s33, %s36
    %p45 = scmp.eq.s32.totalorder %s16, 3
    %p46 = por %p44, %p45
    %p47 = scmp.ne.s32.totalorder %s36, %s37
    %p48 = scmp.eq.s32.totalorder %s16, 0
    %p49 = por %p47, %p48
    %p50 = scmp.ne.s32.totalorder %s36, %s37
    %p51 = scmp.eq.s32.totalorder %s17, 3
    %p52 = por %p50, %p51
    %p54 = scmp.ne.s32.totalorder %s37, %s53
    %p55 = scmp.eq.s32.totalorder %s17, 0
    %p56 = por %p54, %p55
    %s57 = ssub.s32 %s19, %s26
    %p58 = scmp.eq.s32.totalorder %s57, 0
    %s60 = sadd.s32 %s59, 1
    %s61 = scalar_select %p58, %s59, %s60
    %p64 = pneg %p58
    %p65 = scmp.eq.s32.totalorder %s11, 3
    %p66 = por %p64, %p65
    %p67 = scmp.ne.s32.totalorder %s59, %s62
    %p68 = scmp.eq.s32.totalorder %s11, 0
    %p69 = por %p67, %p68
    %p70 = scmp.ne.s32.totalorder %s59, %s62
    %p71 = scmp.eq.s32.totalorder %s16, 3
    %p72 = por %p70, %p71
    %p73 = scmp.ne.s32.totalorder %s62, %s63
    %p74 = scmp.eq.s32.totalorder %s16, 0
    %p75 = por %p73, %p74
    %p76 = scmp.ne.s32.totalorder %s62, %s63
    %p77 = scmp.eq.s32.totalorder %s17, 3
    %p78 = por %p76, %p77
    %p80 = scmp.ne.s32.totalorder %s63, %s79
    %p81 = scmp.eq.s32.totalorder %s17, 0
    %p82 = por %p80, %p81
    %s84 = sadd.s32 %s83, 1
    %p87 = scmp.eq.s32.totalorder %s11, 3
    %p88 = scmp.ne.s32.totalorder %s83, %s85
    %p89 = scmp.eq.s32.totalorder %s11, 0
    %p90 = por %p88, %p89
    %p91 = scmp.ne.s32.totalorder %s83, %s85
    %p92 = scmp.eq.s32.totalorder %s16, 3
    %p93 = por %p91, %p92
    %p94 = scmp.ne.s32.totalorder %s85, %s86
    %p95 = scmp.eq.s32.totalorder %s16, 0
    %p96 = por %p94, %p95
    %p97 = scmp.ne.s32.totalorder %s85, %s86
    %p98 = scmp.eq.s32.totalorder %s17, 3
    %p99 = por %p97, %p98
    %p101 = scmp.ne.s32.totalorder %s86, %s100
    %p102 = scmp.eq.s32.totalorder %s17, 0
    %p103 = por %p101, %p102
    %s105 = sadd.s32 %s104, 1
    %p108 = scmp.eq.s32.totalorder %s11, 3
    %p109 = scmp.ne.s32.totalorder %s104, %s106
    %p110 = scmp.eq.s32.totalorder %s11, 0
    %p111 = por %p109, %p110
    %p112 = scmp.ne.s32.totalorder %s104, %s106
    %p113 = scmp.eq.s32.totalorder %s16, 3
    %p114 = por %p112, %p113
    %p115 = scmp.ne.s32.totalorder %s106, %s107
    %p116 = scmp.eq.s32.totalorder %s16, 0
    %p117 = por %p115, %p116
    %p118 = scmp.ne.s32.totalorder %s106, %s107
    %p119 = scmp.eq.s32.totalorder %s17, 3
    %p120 = por %p118, %p119
    %p122 = scmp.ne.s32.totalorder %s107, %s121
    %p123 = scmp.eq.s32.totalorder %s17, 0
    %p124 = por %p122, %p123
    %s126 = sadd.s32 %s125, 1
    %p129 = scmp.eq.s32.totalorder %s11, 3
    %p130 = scmp.ne.s32.totalorder %s125, %s127
    %p131 = scmp.eq.s32.totalorder %s11, 0
    %p132 = por %p130, %p131
    %p133 = scmp.ne.s32.totalorder %s125, %s127
    %p134 = scmp.eq.s32.totalorder %s16, 3
    %p135 = por %p133, %p134
    %p136 = scmp.ne.s32.totalorder %s127, %s128
    %p137 = scmp.eq.s32.totalorder %s16, 0
    %p138 = por %p136, %p137
    %p139 = scmp.ne.s32.totalorder %s127, %s128
    %p140 = scmp.eq.s32.totalorder %s17, 3
    %p141 = por %p139, %p140
    %p143 = scmp.ne.s32.totalorder %s128, %s142
    %p144 = scmp.eq.s32.totalorder %s17, 0
    %p145 = por %p143, %p144
    %s146 = ssub.s32 %s18, %s30
    %s147 = ssub.s32 %s19, %s26
    %s148 = sor.u32 %s146, %s147
    %p149 = scmp.eq.s32.totalorder %s148, 0
    %s151 = sadd.s32 %s150, 1
    %s152 = scalar_select %p149, %s150, %s151
    %p155 = pneg %p149
    %p156 = scmp.eq.s32.totalorder %s11, 3
    %p157 = por %p155, %p156
    %p158 = scmp.ne.s32.totalorder %s150, %s153
    %p159 = scmp.eq.s32.totalorder %s11, 0
    %p160 = por %p158, %p159
    %p161 = scmp.ne.s32.totalorder %s150, %s153
    %p162 = scmp.eq.s32.totalorder %s16, 3
    %p163 = por %p161, %p162
    %p164 = scmp.ne.s32.totalorder %s153, %s154
    %p165 = scmp.eq.s32.totalorder %s16, 0
    %p166 = por %p164, %p165
    %p167 = scmp.ne.s32.totalorder %s153, %s154
    %p168 = scmp.eq.s32.totalorder %s17, 3
    %p169 = por %p167, %p168
    %p171 = scmp.ne.s32.totalorder %s154, %s170
    %p172 = scmp.eq.s32.totalorder %s17, 0
    %p173 = por %p171, %p172
    %p174 = scmp.le.s32.totalorder 1, %s11
    %p175 = scmp.lt.s32.totalorder %s11, 5
    %p176 = pnand %p174, %p175
    %p177 = pneg %p176
    // Predicated region
    $region9: #{upsampling_forward.1} parent=5 // pred_check
      _
    $region10: #{upsampling_forward.1} parent=5 // pred_check_branch
      %179 = sbr.rel (%p176) target = $region12
    $region11: #{upsampling_forward.1} parent=5 // pred_region
      %s180 = ssub.s32 %s11, 1
      // Predicated region
      $region13: #{upsampling_forward.1} parent=11 // pred_check
        %p181 = pneg %p96
      $region14: #{upsampling_forward.1} parent=11 // pred_check_branch
        %183 = sbr.rel (%p181) target = $region16
      $region15: #{upsampling_forward.1} parent=11 // pred_region
        _
      $region16: #{upsampling_forward.1} parent=11 // pred_fallthru
        _
      // Predicated region
      $region17: #{upsampling_forward.1} parent=11 // pred_check
        %p184 = pneg %p117
      $region18: #{upsampling_forward.1} parent=11 // pred_check_branch
        %186 = sbr.rel (%p184) target = $region20
      $region19: #{upsampling_forward.1} parent=11 // pred_region
        _
      $region20: #{upsampling_forward.1} parent=11 // pred_fallthru
        _
      // Predicated region
      $region21: #{upsampling_forward.1} parent=11 // pred_check
        %p187 = pneg %p138
      $region22: #{upsampling_forward.1} parent=11 // pred_check_branch
        %189 = sbr.rel (%p187) target = $region24
      $region23: #{upsampling_forward.1} parent=11 // pred_region
        _
      $region24: #{upsampling_forward.1} parent=11 // pred_fallthru
        _
    $region12: #{upsampling_forward.1} parent=5 // pred_fallthru
      _
    %p190 = scmp.lt.s32.totalorder %s11, 4
    // Predicated region
    $region25: #{upsampling_forward.1} parent=5 // pred_check
      %p191 = pneg %p190
    $region26: #{upsampling_forward.1} parent=5 // pred_check_branch
      %193 = sbr.rel (%p191) target = $region28
    $region27: #{upsampling_forward.1} parent=5 // pred_region
      // Predicated region
      $region29: #{upsampling_forward.1} parent=27 // pred_check
        %p194 = pneg %p43
      $region30: #{upsampling_forward.1} parent=27 // pred_check_branch
        %196 = sbr.rel (%p194) target = $region32
      $region31: #{upsampling_forward.1} parent=27 // pred_region
        %p197 = scmp.lt.s32.totalorder %s18, 1
        %s198 = scalar_select %p197, %s18, 1
        %s199 = smul.addr %s198, 2
        %s200 = smul.addr %s199, 4
        %s201 = scalar_lea.vmem %s0, %s200
      $region32: #{upsampling_forward.1} parent=27 // pred_fallthru
        _
      // Predicated region
      $region33: #{upsampling_forward.1} parent=27 // pred_check
        %p202 = pneg %p69
      $region34: #{upsampling_forward.1} parent=27 // pred_check_branch
        %204 = sbr.rel (%p202) target = $region36
      $region35: #{upsampling_forward.1} parent=27 // pred_region
        %p205 = scmp.lt.s32.totalorder %s19, 1
        %s206 = scalar_select %p205, %s19, 1
        %s207 = smul.addr %s206, 128
        %s208 = smul.addr %s207, 4
        %s209 = scalar_lea.vmem %s1, %s208
      $region36: #{upsampling_forward.1} parent=27 // pred_fallthru
        _
    $region28: #{upsampling_forward.1} parent=5 // pred_fallthru
      _
    %p210 = scmp.le.s32.totalorder 1, %s11
    %p211 = scmp.lt.s32.totalorder %s11, 5
    %p212 = pnand %p210, %p211
    %p213 = pneg %p212
    // Predicated region
    $region37: #{upsampling_forward.1} parent=5 // pred_check
      _
    $region38: #{upsampling_forward.1} parent=5 // pred_check_branch
      %215 = sbr.rel (%p212) target = $region40
    $region39: #{upsampling_forward.1} parent=5 // pred_region
      %s216 = ssub.s32 %s11, 1
      %p217 = scmp.lt.s32.totalorder %s20, 1
      %s218 = scalar_select %p217, %s20, 1
      %s219 = smul.addr %s218, 2
      %s220 = smul.addr %s219, 4
      %s221 = scalar_lea.vmem %s0, %s220
      %p222 = pneg %p49
      %p223 = pneg %p46
      %p224 = scmp.lt.s32.totalorder %s21, 1
      %s225 = scalar_select %p224, %s21, 1
      %s226 = smul.addr %s225, 128
      %s227 = smul.addr %s226, 4
      %s228 = scalar_lea.vmem %s1, %s227
      %p229 = pneg %p75
      %p230 = pneg %p72
      %p231 = pneg %p96
      %p232 = pneg %p93
      %p233 = pneg %p117
      %p234 = pneg %p114
      %p235 = pneg %p138
      %p236 = pneg %p135
      %p237 = pneg %p166
      %p238 = pneg %p163
      %s239 = smul.u32 4, %s21
      %p240 = scmp.lt.s32.totalorder %s20, 1
      %s241 = scalar_select %p240, %s20, 1
      %p242 = scmp.lt.s32.totalorder %s239, 7
      %s243 = scalar_select %p242, %s239, 7
      %s244 = smul.addr %s243, 4
      %s245 = smul.addr %s241, 32
      %s246 = sadd.s32 %s244, %s245
      %s247 = smul.addr %s246, 8
      %s248 = scalar_lea.vmem %s5, %s247
      %p249 = scmp.lt.s32.totalorder %s20, 1
      %s250 = scalar_select %p249, %s20, 1
      %s251 = smul.addr %s250, 2
      %s252 = smul.addr %s251, 4
      %s253 = scalar_lea.vmem %s0, %s252
      %p254 = scmp.lt.s32.totalorder %s21, 1
      %s255 = scalar_select %p254, %s21, 1
      %s256 = smul.addr %s255, 128
      %s257 = smul.addr %s256, 4
      %s258 = scalar_lea.vmem %s1, %s257
      %s259 = smul.u32 4, %s21
      %p260 = scmp.lt.s32.totalorder %s20, 1
      %s261 = scalar_select %p260, %s20, 1
      %p262 = scmp.lt.s32.totalorder %s259, 7
      %s263 = scalar_select %p262, %s259, 7
      %s264 = smul.addr %s263, 4
      %s265 = smul.addr %s261, 32
      %s266 = sadd.s32 %s264, %s265
      %s267 = smul.addr %s266, 8
      %s268 = scalar_lea.vmem %s5, %s267
      %s269 = smul.u32 4, %s21
      %v271 = vld [vmem:[%s253] sm:$0xff]
      %v272 = vld [vmem:[%s258] sm:$0xff]
      %v273 = vld [vmem:[%s258 + $0x8] sm:$0xff]
      %v274 = vld [vmem:[%s258 + $0x10] sm:$0xff]
      %v275 = vld [vmem:[%s258 + $0x18] sm:$0xff]
      %v276 = vld [vmem:[%s258 + $0x20] sm:$0xff]
      %v277 = vld [vmem:[%s258 + $0x28] sm:$0xff]
      %v278 = vld [vmem:[%s258 + $0x30] sm:$0xff]
      %v279 = vld [vmem:[%s258 + $0x38] sm:$0xff]
      %v280 = vld [vmem:[%s258 + $0x40] sm:$0xff]
      %v281 = vld [vmem:[%s258 + $0x48] sm:$0xff]
      %v282 = vld [vmem:[%s258 + $0x50] sm:$0xff]
      %v283 = vld [vmem:[%s258 + $0x58] sm:$0xff]
      %v284 = vld [vmem:[%s258 + $0x60] sm:$0xff]
      %v285 = vld [vmem:[%s258 + $0x68] sm:$0xff]
      %v286 = vld [vmem:[%s258 + $0x70] sm:$0xff]
      %v287 = vld [vmem:[%s258 + $0x78] sm:$0xff]
      %v288 = vld [vmem:[%s258 + $0x80] sm:$0xff]
      %v289 = vld [vmem:[%s258 + $0x88] sm:$0xff]
      %v290 = vld [vmem:[%s258 + $0x90] sm:$0xff]
      %v291 = vld [vmem:[%s258 + $0x98] sm:$0xff]
      %v292 = vld [vmem:[%s258 + $0xa0] sm:$0xff]
      %v293 = vld [vmem:[%s258 + $0xa8] sm:$0xff]
      %v294 = vld [vmem:[%s258 + $0xb0] sm:$0xff]
      %v295 = vld [vmem:[%s258 + $0xb8] sm:$0xff]
      %v296 = vld [vmem:[%s258 + $0xc0] sm:$0xff]
      %v297 = vld [vmem:[%s258 + $0xc8] sm:$0xff]
      %v298 = vld [vmem:[%s258 + $0xd0] sm:$0xff]
      %v299 = vld [vmem:[%s258 + $0xd8] sm:$0xff]
      %v300 = vld [vmem:[%s258 + $0xe0] sm:$0xff]
      %v301 = vld [vmem:[%s258 + $0xe8] sm:$0xff]
      %v302 = vld [vmem:[%s258 + $0xf0] sm:$0xff]
      %v303 = vld [vmem:[%s258 + $0xf8] sm:$0xff]
      %v304 = vld [vmem:[%s258 + $0x100] sm:$0xff]
      %v305 = vld [vmem:[%s258 + $0x108] sm:$0xff]
      %v306 = vld [vmem:[%s258 + $0x110] sm:$0xff]
      %v307 = vld [vmem:[%s258 + $0x118] sm:$0xff]
      %v308 = vld [vmem:[%s258 + $0x120] sm:$0xff]
      %v309 = vld [vmem:[%s258 + $0x128] sm:$0xff]
      %v310 = vld [vmem:[%s258 + $0x130] sm:$0xff]
      %v311 = vld [vmem:[%s258 + $0x138] sm:$0xff]
      %v312 = vld [vmem:[%s258 + $0x140] sm:$0xff]
      %v313 = vld [vmem:[%s258 + $0x148] sm:$0xff]
      %v314 = vld [vmem:[%s258 + $0x150] sm:$0xff]
      %v315 = vld [vmem:[%s258 + $0x158] sm:$0xff]
      %v316 = vld [vmem:[%s258 + $0x160] sm:$0xff]
      %v317 = vld [vmem:[%s258 + $0x168] sm:$0xff]
      %v318 = vld [vmem:[%s258 + $0x170] sm:$0xff]
      %v319 = vld [vmem:[%s258 + $0x178] sm:$0xff]
      %v320 = vld [vmem:[%s258 + $0x180] sm:$0xff]
      %v321 = vld [vmem:[%s258 + $0x188] sm:$0xff]
      %v322 = vld [vmem:[%s258 + $0x190] sm:$0xff]
      %v323 = vld [vmem:[%s258 + $0x198] sm:$0xff]
      %v324 = vld [vmem:[%s258 + $0x1a0] sm:$0xff]
      %v325 = vld [vmem:[%s258 + $0x1a8] sm:$0xff]
      %v326 = vld [vmem:[%s258 + $0x1b0] sm:$0xff]
      %v327 = vld [vmem:[%s258 + $0x1b8] sm:$0xff]
      %v328 = vld [vmem:[%s258 + $0x1c0] sm:$0xff]
      %v329 = vld [vmem:[%s258 + $0x1c8] sm:$0xff]
      %v330 = vld [vmem:[%s258 + $0x1d0] sm:$0xff]
      %v331 = vld [vmem:[%s258 + $0x1d8] sm:$0xff]
      %v332 = vld [vmem:[%s258 + $0x1e0] sm:$0xff]
      %v333 = vld [vmem:[%s258 + $0x1e8] sm:$0xff]
      %v334 = vld [vmem:[%s258 + $0x1f0] sm:$0xff]
      %v335 = vld [vmem:[%s258 + $0x1f8] sm:$0xff]
      %v337 = vunpack.c.l.b16 %v271
      %v338 = vunpack.c.h.b16 %v271
      %v339 = vpack.c.b16 %v337, %v337
      %v340 = vpack.c.b16 %v338, %v338
      %v407 = vunpack.c.l.b16 %v272
      %v408 = vunpack.c.h.b16 %v272
      %v409 = vunpack.c.l.b16 %v273
      %v410 = vunpack.c.h.b16 %v273
      %v411 = vunpack.c.l.b16 %v274
      %v412 = vunpack.c.h.b16 %v274
      %v413 = vunpack.c.l.b16 %v275
      %v414 = vunpack.c.h.b16 %v275
      %v415 = vunpack.c.l.b16 %v276
      %v416 = vunpack.c.h.b16 %v276
      %v417 = vunpack.c.l.b16 %v277
      %v418 = vunpack.c.h.b16 %v277
      %v419 = vunpack.c.l.b16 %v278
      %v420 = vunpack.c.h.b16 %v278
      %v421 = vunpack.c.l.b16 %v279
      %v422 = vunpack.c.h.b16 %v279
      %v423 = vunpack.c.l.b16 %v280
      %v424 = vunpack.c.h.b16 %v280
      %v425 = vunpack.c.l.b16 %v281
      %v426 = vunpack.c.h.b16 %v281
      %v427 = vunpack.c.l.b16 %v282
      %v428 = vunpack.c.h.b16 %v282
      %v429 = vunpack.c.l.b16 %v283
      %v430 = vunpack.c.h.b16 %v283
      %v431 = vunpack.c.l.b16 %v284
      %v432 = vunpack.c.h.b16 %v284
      %v433 = vunpack.c.l.b16 %v285
      %v434 = vunpack.c.h.b16 %v285
      %v435 = vunpack.c.l.b16 %v286
      %v436 = vunpack.c.h.b16 %v286
      %v437 = vunpack.c.l.b16 %v287
      %v438 = vunpack.c.h.b16 %v287
      %v439 = vunpack.c.l.b16 %v288
      %v440 = vunpack.c.h.b16 %v288
      %v441 = vunpack.c.l.b16 %v289
      %v442 = vunpack.c.h.b16 %v289
      %v443 = vunpack.c.l.b16 %v290
      %v444 = vunpack.c.h.b16 %v290
      %v445 = vunpack.c.l.b16 %v291
      %v446 = vunpack.c.h.b16 %v291
      %v447 = vunpack.c.l.b16 %v292
      %v448 = vunpack.c.h.b16 %v292
      %v449 = vunpack.c.l.b16 %v293
      %v450 = vunpack.c.h.b16 %v293
      %v451 = vunpack.c.l.b16 %v294
      %v452 = vunpack.c.h.b16 %v294
      %v453 = vunpack.c.l.b16 %v295
      %v454 = vunpack.c.h.b16 %v295
      %v455 = vunpack.c.l.b16 %v296
      %v456 = vunpack.c.h.b16 %v296
      %v457 = vunpack.c.l.b16 %v297
      %v458 = vunpack.c.h.b16 %v297
      %v459 = vunpack.c.l.b16 %v298
      %v460 = vunpack.c.h.b16 %v298
      %v461 = vunpack.c.l.b16 %v299
      %v462 = vunpack.c.h.b16 %v299
      %v463 = vunpack.c.l.b16 %v300
      %v464 = vunpack.c.h.b16 %v300
      %v465 = vunpack.c.l.b16 %v301
      %v466 = vunpack.c.h.b16 %v301
      %v467 = vunpack.c.l.b16 %v302
      %v468 = vunpack.c.h.b16 %v302
      %v469 = vunpack.c.l.b16 %v303
      %v470 = vunpack.c.h.b16 %v303
      %v471 = vunpack.c.l.b16 %v304
      %v472 = vunpack.c.h.b16 %v304
      %v473 = vunpack.c.l.b16 %v305
      %v474 = vunpack.c.h.b16 %v305
      %v475 = vunpack.c.l.b16 %v306
      %v476 = vunpack.c.h.b16 %v306
      %v477 = vunpack.c.l.b16 %v307
      %v478 = vunpack.c.h.b16 %v307
      %v479 = vunpack.c.l.b16 %v308
      %v480 = vunpack.c.h.b16 %v308
      %v481 = vunpack.c.l.b16 %v309
      %v482 = vunpack.c.h.b16 %v309
      %v483 = vunpack.c.l.b16 %v310
      %v484 = vunpack.c.h.b16 %v310
      %v485 = vunpack.c.l.b16 %v311
      %v486 = vunpack.c.h.b16 %v311
      %v487 = vunpack.c.l.b16 %v312
      %v488 = vunpack.c.h.b16 %v312
      %v489 = vunpack.c.l.b16 %v313
      %v490 = vunpack.c.h.b16 %v313
      %v491 = vunpack.c.l.b16 %v314
      %v492 = vunpack.c.h.b16 %v314
      %v493 = vunpack.c.l.b16 %v315
      %v494 = vunpack.c.h.b16 %v315
      %v495 = vunpack.c.l.b16 %v316
      %v496 = vunpack.c.h.b16 %v316
      %v497 = vunpack.c.l.b16 %v317
      %v498 = vunpack.c.h.b16 %v317
      %v499 = vunpack.c.l.b16 %v318
      %v500 = vunpack.c.h.b16 %v318
      %v501 = vunpack.c.l.b16 %v319
      %v502 = vunpack.c.h.b16 %v319
      %v503 = vunpack.c.l.b16 %v320
      %v504 = vunpack.c.h.b16 %v320
      %v505 = vunpack.c.l.b16 %v321
      %v506 = vunpack.c.h.b16 %v321
      %v507 = vunpack.c.l.b16 %v322
      %v508 = vunpack.c.h.b16 %v322
      %v509 = vunpack.c.l.b16 %v323
      %v510 = vunpack.c.h.b16 %v323
      %v511 = vunpack.c.l.b16 %v324
      %v512 = vunpack.c.h.b16 %v324
      %v513 = vunpack.c.l.b16 %v325
      %v514 = vunpack.c.h.b16 %v325
      %v515 = vunpack.c.l.b16 %v326
      %v516 = vunpack.c.h.b16 %v326
      %v517 = vunpack.c.l.b16 %v327
      %v518 = vunpack.c.h.b16 %v327
      %v519 = vunpack.c.l.b16 %v328
      %v520 = vunpack.c.h.b16 %v328
      %v521 = vunpack.c.l.b16 %v329
      %v522 = vunpack.c.h.b16 %v329
      %v523 = vunpack.c.l.b16 %v330
      %v524 = vunpack.c.h.b16 %v330
      %v525 = vunpack.c.l.b16 %v331
      %v526 = vunpack.c.h.b16 %v331
      %v527 = vunpack.c.l.b16 %v332
      %v528 = vunpack.c.h.b16 %v332
      %v529 = vunpack.c.l.b16 %v333
      %v530 = vunpack.c.h.b16 %v333
      %v531 = vunpack.c.l.b16 %v334
      %v532 = vunpack.c.h.b16 %v334
      %v533 = vunpack.c.l.b16 %v335
      %v534 = vunpack.c.h.b16 %v335
      %v535 = vpack.c.b16 %v411, %v407
      %v536 = vpack.c.b16 %v412, %v408
      %v537 = vpack.c.b16 %v413, %v409
      %v538 = vpack.c.b16 %v414, %v410
      %v539 = vpack.c.b16 %v419, %v415
      %v540 = vpack.c.b16 %v420, %v416
      %v541 = vpack.c.b16 %v421, %v417
      %v542 = vpack.c.b16 %v422, %v418
      %v543 = vpack.c.b16 %v427, %v423
      %v544 = vpack.c.b16 %v428, %v424
      %v545 = vpack.c.b16 %v429, %v425
      %v546 = vpack.c.b16 %v430, %v426
      %v547 = vpack.c.b16 %v435, %v431
      %v548 = vpack.c.b16 %v436, %v432
      %v549 = vpack.c.b16 %v437, %v433
      %v550 = vpack.c.b16 %v438, %v434
      %v551 = vpack.c.b16 %v443, %v439
      %v552 = vpack.c.b16 %v444, %v440
      %v553 = vpack.c.b16 %v445, %v441
      %v554 = vpack.c.b16 %v446, %v442
      %v555 = vpack.c.b16 %v451, %v447
      %v556 = vpack.c.b16 %v452, %v448
      %v557 = vpack.c.b16 %v453, %v449
      %v558 = vpack.c.b16 %v454, %v450
      %v559 = vpack.c.b16 %v459, %v455
      %v560 = vpack.c.b16 %v460, %v456
      %v561 = vpack.c.b16 %v461, %v457
      %v562 = vpack.c.b16 %v462, %v458
      %v563 = vpack.c.b16 %v467, %v463
      %v564 = vpack.c.b16 %v468, %v464
      %v565 = vpack.c.b16 %v469, %v465
      %v566 = vpack.c.b16 %v470, %v466
      %v567 = vpack.c.b16 %v475, %v471
      %v568 = vpack.c.b16 %v476, %v472
      %v569 = vpack.c.b16 %v477, %v473
      %v570 = vpack.c.b16 %v478, %v474
      %v571 = vpack.c.b16 %v483, %v479
      %v572 = vpack.c.b16 %v484, %v480
      %v573 = vpack.c.b16 %v485, %v481
      %v574 = vpack.c.b16 %v486, %v482
      %v575 = vpack.c.b16 %v491, %v487
      %v576 = vpack.c.b16 %v492, %v488
      %v577 = vpack.c.b16 %v493, %v489
      %v578 = vpack.c.b16 %v494, %v490
      %v579 = vpack.c.b16 %v499, %v495
      %v580 = vpack.c.b16 %v500, %v496
      %v581 = vpack.c.b16 %v501, %v497
      %v582 = vpack.c.b16 %v502, %v498
      %v583 = vpack.c.b16 %v507, %v503
      %v584 = vpack.c.b16 %v508, %v504
      %v585 = vpack.c.b16 %v509, %v505
      %v586 = vpack.c.b16 %v510, %v506
      %v587 = vpack.c.b16 %v515, %v511
      %v588 = vpack.c.b16 %v516, %v512
      %v589 = vpack.c.b16 %v517, %v513
      %v590 = vpack.c.b16 %v518, %v514
      %v591 = vpack.c.b16 %v523, %v519
      %v592 = vpack.c.b16 %v524, %v520
      %v593 = vpack.c.b16 %v525, %v521
      %v594 = vpack.c.b16 %v526, %v522
      %v595 = vpack.c.b16 %v531, %v527
      %v596 = vpack.c.b16 %v532, %v528
      %v597 = vpack.c.b16 %v533, %v529
      %v598 = vpack.c.b16 %v534, %v530
      %663 = vmatprep.subr.bf16.mxu0 %v536
      %664 = vmatpush1.bf16.msra.mxu0 %v535
      %665 = vmatprep.subr.bf16.mxu0 %v540
      %666 = vmatpush1.bf16.msra.mxu0 %v539
      %667 = vmatprep.subr.bf16.mxu0 %v544
      %668 = vmatpush1.bf16.msra.mxu0 %v543
      %669 = vmatprep.subr.bf16.mxu0 %v548
      %670 = vmatpush1.bf16.msra.mxu0 %v547
      %671 = vmatprep.subr.bf16.mxu0 %v552
      %672 = vmatpush1.bf16.msra.mxu0 %v551
      %673 = vmatprep.subr.bf16.mxu0 %v556
      %674 = vmatpush1.bf16.msra.mxu0 %v555
      %675 = vmatprep.subr.bf16.mxu0 %v560
      %676 = vmatpush1.bf16.msra.mxu0 %v559
      %677 = vmatprep.subr.bf16.mxu0 %v564
      %678 = vmatpush1.bf16.msra.mxu0 %v563
      %679 = vmatprep.subr.bf16.mxu0 %v568
      %680 = vmatpush1.bf16.msra.mxu0 %v567
      %681 = vmatprep.subr.bf16.mxu0 %v572
      %682 = vmatpush1.bf16.msra.mxu0 %v571
      %683 = vmatprep.subr.bf16.mxu0 %v576
      %684 = vmatpush1.bf16.msra.mxu0 %v575
      %685 = vmatprep.subr.bf16.mxu0 %v580
      %686 = vmatpush1.bf16.msra.mxu0 %v579
      %687 = vmatprep.subr.bf16.mxu0 %v584
      %688 = vmatpush1.bf16.msra.mxu0 %v583
      %689 = vmatprep.subr.bf16.mxu0 %v588
      %690 = vmatpush1.bf16.msra.mxu0 %v587
      %691 = vmatprep.subr.bf16.mxu0 %v592
      %692 = vmatpush1.bf16.msra.mxu0 %v591
      %693 = vmatprep.subr.bf16.mxu0 %v596
      %694 = vmatpush1.bf16.msra.mxu0 %v595
      %695 = vmatprep.mubr.bf16.mxu0 %v340
      %696 = vmatmul.mubr.bf16.gmra.mrb[0].mxu0 %v339
      %v697 = vpop.f32.mrb[0].mxu0
      %v698 = vadd.f32 0.0, %v697
      %v699 = vpop.f32.mrb[0].mxu0
      %v700 = vadd.f32 0.0, %v699
      %v701 = vpop.f32.mrb[0].mxu0
      %v702 = vpop.f32.mrb[0].mxu0
      %703 = vdwg.mxu0
      %704 = vmatprep.subr.bf16.mxu0 %v538
      %705 = vmatpush1.bf16.msra.mxu0 %v537
      %706 = vmatprep.subr.bf16.mxu0 %v542
      %707 = vmatpush1.bf16.msra.mxu0 %v541
      %708 = vmatprep.subr.bf16.mxu0 %v546
      %709 = vmatpush1.bf16.msra.mxu0 %v545
      %710 = vmatprep.subr.bf16.mxu0 %v550
      %711 = vmatpush1.bf16.msra.mxu0 %v549
      %712 = vmatprep.subr.bf16.mxu0 %v554
      %713 = vmatpush1.bf16.msra.mxu0 %v553
      %714 = vmatprep.subr.bf16.mxu0 %v558
      %715 = vmatpush1.bf16.msra.mxu0 %v557
      %716 = vmatprep.subr.bf16.mxu0 %v562
      %717 = vmatpush1.bf16.msra.mxu0 %v561
      %718 = vmatprep.subr.bf16.mxu0 %v566
      %719 = vmatpush1.bf16.msra.mxu0 %v565
      %720 = vmatprep.subr.bf16.mxu0 %v570
      %721 = vmatpush1.bf16.msra.mxu0 %v569
      %722 = vmatprep.subr.bf16.mxu0 %v574
      %723 = vmatpush1.bf16.msra.mxu0 %v573
      %724 = vmatprep.subr.bf16.mxu0 %v578
      %725 = vmatpush1.bf16.msra.mxu0 %v577
      %726 = vmatprep.subr.bf16.mxu0 %v582
      %727 = vmatpush1.bf16.msra.mxu0 %v581
      %728 = vmatprep.subr.bf16.mxu0 %v586
      %729 = vmatpush1.bf16.msra.mxu0 %v585
      %730 = vmatprep.subr.bf16.mxu0 %v590
      %731 = vmatpush1.bf16.msra.mxu0 %v589
      %732 = vmatprep.subr.bf16.mxu0 %v594
      %733 = vmatpush1.bf16.msra.mxu0 %v593
      %734 = vmatprep.subr.bf16.mxu0 %v598
      %735 = vmatpush1.bf16.msra.mxu0 %v597
      %736 = vmatprep.mubr.bf16.mxu0 %v340
      %737 = vmatmul.mubr.bf16.gmra.mrb[0].mxu0 %v339
      %v738 = vpop.f32.mrb[0].mxu0
      %v739 = vadd.f32 0.0, %v738
      %v740 = vpop.f32.mrb[0].mxu0
      %v741 = vadd.f32 0.0, %v740
      %v742 = vpop.f32.mrb[0].mxu0
      %v743 = vpop.f32.mrb[0].mxu0
      %744 = vdwg.mxu0
      %v745 = vpack.c.bf16 %v698, %v698
      %v746 = vpack.c.bf16 %v700, %v700
      %v747 = vpack.c.bf16 %v739, %v739
      %v748 = vpack.c.bf16 %v741, %v741
      %v749 = vld [vmem:[%s2] sm:$0xf]
      %v750 = vld [vmem:[%s2 + $0x4] sm:$0xf]
      %v751 = vld [vmem:[%s2 + $0x8] sm:$0xf]
      %v752 = vld [vmem:[%s2 + $0xc] sm:$0xf]
      %v753 = vld [vmem:[%s2 + $0x10] sm:$0xf]
      %v754 = vld [vmem:[%s2 + $0x14] sm:$0xf]
      %v761 = vunpack.c.l.b16 %v749
      %v762 = vunpack.c.l.b16 %v750
      %v763 = vunpack.c.l.b16 %v751
      %v764 = vunpack.c.l.b16 %v752
      %v765 = vunpack.c.l.b16 %v753
      %v766 = vunpack.c.l.b16 %v754
      %v767 = vpack.c.b16 %v762, %v761
      %v768 = vpack.c.b16 %v764, %v763
      %v769 = vpack.c.b16 %v766, %v765
      %vm770 = vcmask 64512
      %v772 = vsel %vm770, %v767, 0
      %v775 = vsel %vm770, %v768, 0
      %v778 = vsel %vm770, %v769, 0
      %vm780 = vcmask 1043456
      %v782 = vsel %vm780, %v745, 0
      %v785 = vsel %vm780, %v746, 0
      %v788 = vsel %vm780, %v747, 0
      %v791 = vsel %vm780, %v748, 0
      %793 = vmatprep.subr.bf16.mxu0 %v785
      %794 = vmatpush1.bf16.msra.mxu0 %v782
      %795 = vmatprep.subr.bf16.mxu0 0
      %796 = vmatpush1.bf16.msra.mxu0 0
      %797 = vmatprep.subr.bf16.mxu0 0
      %798 = vmatpush1.bf16.msra.mxu0 0
      %799 = vmatprep.subr.bf16.mxu0 0
      %800 = vmatpush1.bf16.msra.mxu0 0
      %801 = vmatprep.subr.bf16.mxu0 0
      %802 = vmatpush1.bf16.msra.mxu0 0
      %803 = vmatprep.subr.bf16.mxu0 0
      %804 = vmatpush1.bf16.msra.mxu0 0
      %805 = vmatprep.subr.bf16.mxu0 0
      %806 = vmatpush1.bf16.msra.mxu0 0
      %807 = vmatprep.subr.bf16.mxu0 0
      %808 = vmatpush1.bf16.msra.mxu0 0
      %809 = vmatprep.subr.bf16.mxu0 0
      %810 = vmatpush1.bf16.msra.mxu0 0
      %811 = vmatprep.subr.bf16.mxu0 0
      %812 = vmatpush1.bf16.msra.mxu0 0
      %813 = vmatprep.subr.bf16.mxu0 0
      %814 = vmatpush1.bf16.msra.mxu0 0
      %815 = vmatprep.subr.bf16.mxu0 0
      %816 = vmatpush1.bf16.msra.mxu0 0
      %817 = vmatprep.subr.bf16.mxu0 0
      %818 = vmatpush1.bf16.msra.mxu0 0
      %819 = vmatprep.subr.bf16.mxu0 0
      %820 = vmatpush1.bf16.msra.mxu0 0
      %821 = vmatprep.subr.bf16.mxu0 0
      %822 = vmatpush1.bf16.msra.mxu0 0
      %823 = vmatprep.subr.bf16.mxu0 0
      %824 = vmatpush1.bf16.msra.mxu0 0
      %825 = vmatprep.mubr.bf16.mxu0 0
      %826 = vmatmul.mubr.bf16.gmra.mrb[0].mxu0 %v772
      %v827 = vpop.f32.mrb[0].mxu0
      %v828 = vadd.f32 0.0, %v827
      %v829 = vpop.f32.mrb[0].mxu0
      %v830 = vadd.f32 0.0, %v829
      %v831 = vpop.f32.mrb[0].mxu0
      %v832 = vadd.f32 0.0, %v831
      %v833 = vpop.f32.mrb[0].mxu0
      %v834 = vadd.f32 0.0, %v833
      %835 = vmatprep.mubr.bf16.mxu0 0
      %836 = vmatmul.mubr.bf16.gmra.mrb[0].mxu0 %v775
      %v837 = vpop.f32.mrb[0].mxu0
      %v838 = vadd.f32 0.0, %v837
      %v839 = vpop.f32.mrb[0].mxu0
      %v840 = vadd.f32 0.0, %v839
      %v841 = vpop.f32.mrb[0].mxu0
      %v842 = vadd.f32 0.0, %v841
      %v843 = vpop.f32.mrb[0].mxu0
      %v844 = vadd.f32 0.0, %v843
      %845 = vmatprep.mubr.bf16.mxu0 0
      %846 = vmatmul.mubr.bf16.gmra.mrb[0].mxu0 %v778
      %v847 = vpop.f32.mrb[0].mxu0
      %v848 = vadd.f32 0.0, %v847
      %v849 = vpop.f32.mrb[0].mxu0
      %v850 = vadd.f32 0.0, %v849
      %v851 = vpop.f32.mrb[0].mxu0
      %v852 = vadd.f32 0.0, %v851
      %v853 = vpop.f32.mrb[0].mxu0
      %v854 = vadd.f32 0.0, %v853
      %855 = vdwg.mxu0
      %856 = vmatprep.subr.bf16.mxu0 %v791
      %857 = vmatpush1.bf16.msra.mxu0 %v788
      %858 = vmatprep.subr.bf16.mxu0 0
      %859 = vmatpush1.bf16.msra.mxu0 0
      %860 = vmatprep.subr.bf16.mxu0 0
      %861 = vmatpush1.bf16.msra.mxu0 0
      %862 = vmatprep.subr.bf16.mxu0 0
      %863 = vmatpush1.bf16.msra.mxu0 0
      %864 = vmatprep.subr.bf16.mxu0 0
      %865 = vmatpush1.bf16.msra.mxu0 0
      %866 = vmatprep.subr.bf16.mxu0 0
      %867 = vmatpush1.bf16.msra.mxu0 0
      %868 = vmatprep.subr.bf16.mxu0 0
      %869 = vmatpush1.bf16.msra.mxu0 0
      %870 = vmatprep.subr.bf16.mxu0 0
      %871 = vmatpush1.bf16.msra.mxu0 0
      %872 = vmatprep.subr.bf16.mxu0 0
      %873 = vmatpush1.bf16.msra.mxu0 0
      %874 = vmatprep.subr.bf16.mxu0 0
      %875 = vmatpush1.bf16.msra.mxu0 0
      %876 = vmatprep.subr.bf16.mxu0 0
      %877 = vmatpush1.bf16.msra.mxu0 0
      %878 = vmatprep.subr.bf16.mxu0 0
      %879 = vmatpush1.bf16.msra.mxu0 0
      %880 = vmatprep.subr.bf16.mxu0 0
      %881 = vmatpush1.bf16.msra.mxu0 0
      %882 = vmatprep.subr.bf16.mxu0 0
      %883 = vmatpush1.bf16.msra.mxu0 0
      %884 = vmatprep.subr.bf16.mxu0 0
      %885 = vmatpush1.bf16.msra.mxu0 0
      %886 = vmatprep.subr.bf16.mxu0 0
      %887 = vmatpush1.bf16.msra.mxu0 0
      %888 = vmatprep.mubr.bf16.mxu0 0
      %889 = vmatmul.mubr.bf16.gmra.mrb[0].mxu0 %v772
      %v890 = vpop.f32.mrb[0].mxu0
      %v891 = vadd.f32 0.0, %v890
      %v892 = vpop.f32.mrb[0].mxu0
      %v893 = vadd.f32 0.0, %v892
      %v894 = vpop.f32.mrb[0].mxu0
      %v895 = vadd.f32 0.0, %v894
      %v896 = vpop.f32.mrb[0].mxu0
      %v897 = vadd.f32 0.0, %v896
      %898 = vmatprep.mubr.bf16.mxu0 0
      %899 = vmatmul.mubr.bf16.gmra.mrb[0].mxu0 %v775
      %v900 = vpop.f32.mrb[0].mxu0
      %v901 = vadd.f32 0.0, %v900
      %v902 = vpop.f32.mrb[0].mxu0
      %v903 = vadd.f32 0.0, %v902
      %v904 = vpop.f32.mrb[0].mxu0
      %v905 = vadd.f32 0.0, %v904
      %v906 = vpop.f32.mrb[0].mxu0
      %v907 = vadd.f32 0.0, %v906
      %908 = vmatprep.mubr.bf16.mxu0 0
      %909 = vmatmul.mubr.bf16.gmra.mrb[0].mxu0 %v778
      %v910 = vpop.f32.mrb[0].mxu0
      %v911 = vadd.f32 0.0, %v910
      %v912 = vpop.f32.mrb[0].mxu0
      %v913 = vadd.f32 0.0, %v912
      %v914 = vpop.f32.mrb[0].mxu0
      %v915 = vadd.f32 0.0, %v914
      %v916 = vpop.f32.mrb[0].mxu0
      %v917 = vadd.f32 0.0, %v916
      %918 = vdwg.mxu0
      %v919 = vpack.c.bf16 %v832, %v828
      %v920 = vpack.c.bf16 %v834, %v830
      %v921 = vpack.c.bf16 %v895, %v891
      %v922 = vpack.c.bf16 %v897, %v893
      %v923 = vpack.c.bf16 %v842, %v838
      %v924 = vpack.c.bf16 %v844, %v840
      %v925 = vpack.c.bf16 %v905, %v901
      %v926 = vpack.c.bf16 %v907, %v903
      %v927 = vpack.c.bf16 %v852, %v848
      %v928 = vpack.c.bf16 %v854, %v850
      %v929 = vpack.c.bf16 %v915, %v911
      %v930 = vpack.c.bf16 %v917, %v913
      %v931 = vld [vmem:[%s3] sm:$0xff]
      %v932 = vld [vmem:[%s3 + $0x8] sm:$0xff]
      %v933 = vld [vmem:[%s3 + $0x10] sm:$0xff]
      %v934 = vld [vmem:[%s3 + $0x18] sm:$0xff]
      %v935 = vld [vmem:[%s3 + $0x20] sm:$0xff]
      %v936 = vld [vmem:[%s3 + $0x28] sm:$0xff]
      %v937 = vld [vmem:[%s3 + $0x30] sm:$0xff]
      %v938 = vld [vmem:[%s3 + $0x38] sm:$0xff]
      %v939 = vld [vmem:[%s3 + $0x40] sm:$0xff]
      %v940 = vld [vmem:[%s3 + $0x48] sm:$0xff]
      %v941 = vld [vmem:[%s3 + $0x50] sm:$0xff]
      %v942 = vld [vmem:[%s3 + $0x58] sm:$0xff]
      %v943 = vld [vmem:[%s3 + $0x60] sm:$0xff]
      %v944 = vld [vmem:[%s3 + $0x68] sm:$0xff]
      %v945 = vld [vmem:[%s3 + $0x70] sm:$0xff]
      %v946 = vld [vmem:[%s3 + $0x78] sm:$0xff]
      %v947 = vld [vmem:[%s3 + $0x80] sm:$0xff]
      %v948 = vld [vmem:[%s3 + $0x88] sm:$0xff]
      %v949 = vld [vmem:[%s3 + $0x90] sm:$0xff]
      %v950 = vld [vmem:[%s3 + $0x98] sm:$0xff]
      %v951 = vld [vmem:[%s3 + $0xa0] sm:$0xff]
      %v952 = vld [vmem:[%s3 + $0xa8] sm:$0xff]
      %v953 = vld [vmem:[%s3 + $0xb0] sm:$0xff]
      %v954 = vld [vmem:[%s3 + $0xb8] sm:$0xff]
      %v955 = vld [vmem:[%s3 + $0xc0] sm:$0xff]
      %v956 = vld [vmem:[%s3 + $0xc8] sm:$0xff]
      %v957 = vld [vmem:[%s3 + $0xd0] sm:$0xff]
      %v958 = vld [vmem:[%s3 + $0xd8] sm:$0xff]
      %v959 = vld [vmem:[%s3 + $0xe0] sm:$0xff]
      %v960 = vld [vmem:[%s3 + $0xe8] sm:$0xff]
      %v961 = vld [vmem:[%s3 + $0xf0] sm:$0xff]
      %v962 = vld [vmem:[%s3 + $0xf8] sm:$0xff]
      %v963 = vld [vmem:[%s3 + $0x100] sm:$0xff]
      %v964 = vld [vmem:[%s3 + $0x108] sm:$0xff]
      %v965 = vld [vmem:[%s3 + $0x110] sm:$0xff]
      %v966 = vld [vmem:[%s3 + $0x118] sm:$0xff]
      %v967 = vld [vmem:[%s3 + $0x120] sm:$0xff]
      %v968 = vld [vmem:[%s3 + $0x128] sm:$0xff]
      %v969 = vld [vmem:[%s3 + $0x130] sm:$0xff]
      %v970 = vld [vmem:[%s3 + $0x138] sm:$0xff]
      %v971 = vld [vmem:[%s3 + $0x140] sm:$0xff]
      %v972 = vld [vmem:[%s3 + $0x148] sm:$0xff]
      %v973 = vld [vmem:[%s3 + $0x150] sm:$0xff]
      %v974 = vld [vmem:[%s3 + $0x158] sm:$0xff]
      %v975 = vld [vmem:[%s3 + $0x160] sm:$0xff]
      %v976 = vld [vmem:[%s3 + $0x168] sm:$0xff]
      %v977 = vld [vmem:[%s3 + $0x170] sm:$0xff]
      %v978 = vld [vmem:[%s3 + $0x178] sm:$0xff]
      %v979 = vld [vmem:[%s4] sm:$0x3]
      %v981 = vlaneseq
      %v982 = vshrl.u32 %v981, 7
      %v983 = vsub.s32 0, %v982
      %v984 = vrot.slane %v979, %v983
      %v985 = vlaneseq
      %v986 = vshrl.u32 %v985, 7
      %v987 = vsub.s32 1, %v986
      %v988 = vrot.slane %v979, %v987
      %v1039 = vunpack.c.l.b16 %v931
      %v1040 = vunpack.c.h.b16 %v931
      %v1041 = vunpack.c.l.b16 %v932
      %v1042 = vunpack.c.h.b16 %v932
      %v1043 = vunpack.c.l.b16 %v933
      %v1044 = vunpack.c.h.b16 %v933
      %v1045 = vunpack.c.l.b16 %v934
      %v1046 = vunpack.c.h.b16 %v934
      %v1047 = vunpack.c.l.b16 %v935
      %v1048 = vunpack.c.h.b16 %v935
      %v1049 = vunpack.c.l.b16 %v936
      %v1050 = vunpack.c.h.b16 %v936
      %v1051 = vunpack.c.l.b16 %v937
      %v1052 = vunpack.c.h.b16 %v937
      %v1053 = vunpack.c.l.b16 %v938
      %v1054 = vunpack.c.h.b16 %v938
      %v1055 = vunpack.c.l.b16 %v939
      %v1056 = vunpack.c.h.b16 %v939
      %v1057 = vunpack.c.l.b16 %v940
      %v1058 = vunpack.c.h.b16 %v940
      %v1059 = vunpack.c.l.b16 %v941
      %v1060 = vunpack.c.h.b16 %v941
      %v1061 = vunpack.c.l.b16 %v942
      %v1062 = vunpack.c.h.b16 %v942
      %v1063 = vunpack.c.l.b16 %v943
      %v1064 = vunpack.c.h.b16 %v943
      %v1065 = vunpack.c.l.b16 %v944
      %v1066 = vunpack.c.h.b16 %v944
      %v1067 = vunpack.c.l.b16 %v945
      %v1068 = vunpack.c.h.b16 %v945
      %v1069 = vunpack.c.l.b16 %v946
      %v1070 = vunpack.c.h.b16 %v946
      %v1071 = vunpack.c.l.b16 %v947
      %v1072 = vunpack.c.h.b16 %v947
      %v1073 = vunpack.c.l.b16 %v948
      %v1074 = vunpack.c.h.b16 %v948
      %v1075 = vunpack.c.l.b16 %v949
      %v1076 = vunpack.c.h.b16 %v949
      %v1077 = vunpack.c.l.b16 %v950
      %v1078 = vunpack.c.h.b16 %v950
      %v1079 = vunpack.c.l.b16 %v951
      %v1080 = vunpack.c.h.b16 %v951
      %v1081 = vunpack.c.l.b16 %v952
      %v1082 = vunpack.c.h.b16 %v952
      %v1083 = vunpack.c.l.b16 %v953
      %v1084 = vunpack.c.h.b16 %v953
      %v1085 = vunpack.c.l.b16 %v954
      %v1086 = vunpack.c.h.b16 %v954
      %v1087 = vunpack.c.l.b16 %v955
      %v1088 = vunpack.c.h.b16 %v955
      %v1089 = vunpack.c.l.b16 %v956
      %v1090 = vunpack.c.h.b16 %v956
      %v1091 = vunpack.c.l.b16 %v957
      %v1092 = vunpack.c.h.b16 %v957
      %v1093 = vunpack.c.l.b16 %v958
      %v1094 = vunpack.c.h.b16 %v958
      %v1095 = vunpack.c.l.b16 %v959
      %v1096 = vunpack.c.h.b16 %v959
      %v1097 = vunpack.c.l.b16 %v960
      %v1098 = vunpack.c.h.b16 %v960
      %v1099 = vunpack.c.l.b16 %v961
      %v1100 = vunpack.c.h.b16 %v961
      %v1101 = vunpack.c.l.b16 %v962
      %v1102 = vunpack.c.h.b16 %v962
      %v1103 = vunpack.c.l.b16 %v963
      %v1104 = vunpack.c.h.b16 %v963
      %v1105 = vunpack.c.l.b16 %v964
      %v1106 = vunpack.c.h.b16 %v964
      %v1107 = vunpack.c.l.b16 %v965
      %v1108 = vunpack.c.h.b16 %v965
      %v1109 = vunpack.c.l.b16 %v966
      %v1110 = vunpack.c.h.b16 %v966
      %v1111 = vunpack.c.l.b16 %v967
      %v1112 = vunpack.c.h.b16 %v967
      %v1113 = vunpack.c.l.b16 %v968
      %v1114 = vunpack.c.h.b16 %v968
      %v1115 = vunpack.c.l.b16 %v969
      %v1116 = vunpack.c.h.b16 %v969
      %v1117 = vunpack.c.l.b16 %v970
      %v1118 = vunpack.c.h.b16 %v970
      %v1119 = vunpack.c.l.b16 %v971
      %v1120 = vunpack.c.h.b16 %v971
      %v1121 = vunpack.c.l.b16 %v972
      %v1122 = vunpack.c.h.b16 %v972
      %v1123 = vunpack.c.l.b16 %v973
      %v1124 = vunpack.c.h.b16 %v973
      %v1125 = vunpack.c.l.b16 %v974
      %v1126 = vunpack.c.h.b16 %v974
      %v1127 = vunpack.c.l.b16 %v975
      %v1128 = vunpack.c.h.b16 %v975
      %v1129 = vunpack.c.l.b16 %v976
      %v1130 = vunpack.c.h.b16 %v976
      %v1131 = vunpack.c.l.b16 %v977
      %v1132 = vunpack.c.h.b16 %v977
      %v1133 = vunpack.c.l.b16 %v978
      %v1134 = vunpack.c.h.b16 %v978
      %v1135 = vpack.c.b16 %v1041, %v1039
      %v1136 = vpack.c.b16 %v1042, %v1040
      %v1137 = vpack.c.b16 %v1045, %v1043
      %v1138 = vpack.c.b16 %v1046, %v1044
      %v1139 = vpack.c.b16 %v1049, %v1047
      %v1140 = vpack.c.b16 %v1050, %v1048
      %v1141 = vpack.c.b16 %v1053, %v1051
      %v1142 = vpack.c.b16 %v1054, %v1052
      %v1143 = vpack.c.b16 %v1057, %v1055
      %v1144 = vpack.c.b16 %v1058, %v1056
      %v1145 = vpack.c.b16 %v1061, %v1059
      %v1146 = vpack.c.b16 %v1062, %v1060
      %v1147 = vpack.c.b16 %v1065, %v1063
      %v1148 = vpack.c.b16 %v1066, %v1064
      %v1149 = vpack.c.b16 %v1069, %v1067
      %v1150 = vpack.c.b16 %v1070, %v1068
      %v1151 = vpack.c.b16 %v1073, %v1071
      %v1152 = vpack.c.b16 %v1074, %v1072
      %v1153 = vpack.c.b16 %v1077, %v1075
      %v1154 = vpack.c.b16 %v1078, %v1076
      %v1155 = vpack.c.b16 %v1081, %v1079
      %v1156 = vpack.c.b16 %v1082, %v1080
      %v1157 = vpack.c.b16 %v1085, %v1083
      %v1158 = vpack.c.b16 %v1086, %v1084
      %v1159 = vpack.c.b16 %v1089, %v1087
      %v1160 = vpack.c.b16 %v1090, %v1088
      %v1161 = vpack.c.b16 %v1093, %v1091
      %v1162 = vpack.c.b16 %v1094, %v1092
      %v1163 = vpack.c.b16 %v1097, %v1095
      %v1164 = vpack.c.b16 %v1098, %v1096
      %v1165 = vpack.c.b16 %v1101, %v1099
      %v1166 = vpack.c.b16 %v1102, %v1100
      %v1167 = vpack.c.b16 %v1105, %v1103
      %v1168 = vpack.c.b16 %v1106, %v1104
      %v1169 = vpack.c.b16 %v1109, %v1107
      %v1170 = vpack.c.b16 %v1110, %v1108
      %v1171 = vpack.c.b16 %v1113, %v1111
      %v1172 = vpack.c.b16 %v1114, %v1112
      %v1173 = vpack.c.b16 %v1117, %v1115
      %v1174 = vpack.c.b16 %v1118, %v1116
      %v1175 = vpack.c.b16 %v1121, %v1119
      %v1176 = vpack.c.b16 %v1122, %v1120
      %v1177 = vpack.c.b16 %v1125, %v1123
      %v1178 = vpack.c.b16 %v1126, %v1124
      %v1179 = vpack.c.b16 %v1129, %v1127
      %v1180 = vpack.c.b16 %v1130, %v1128
      %v1181 = vpack.c.b16 %v1133, %v1131
      %v1182 = vpack.c.b16 %v1134, %v1132
      %1231 = vmatprep.subr.bf16.mxu0 %v1136
      %1232 = vmatpush1.bf16.msra.mxu0 %v1135
      %1233 = vmatprep.subr.bf16.mxu0 %v1138
      %1234 = vmatpush1.bf16.msra.mxu0 %v1137
      %1235 = vmatprep.subr.bf16.mxu0 %v1140
      %1236 = vmatpush1.bf16.msra.mxu0 %v1139
      %1237 = vmatprep.subr.bf16.mxu0 %v1142
      %1238 = vmatpush1.bf16.msra.mxu0 %v1141
      %1239 = vmatprep.subr.bf16.mxu0 %v1144
      %1240 = vmatpush1.bf16.msra.mxu0 %v1143
      %1241 = vmatprep.subr.bf16.mxu0 %v1146
      %1242 = vmatpush1.bf16.msra.mxu0 %v1145
      %1243 = vmatprep.subr.bf16.mxu0 %v1148
      %1244 = vmatpush1.bf16.msra.mxu0 %v1147
      %1245 = vmatprep.subr.bf16.mxu0 %v1150
      %1246 = vmatpush1.bf16.msra.mxu0 %v1149
      %1247 = vmatprep.subr.bf16.mxu0 %v1152
      %1248 = vmatpush1.bf16.msra.mxu0 %v1151
      %1249 = vmatprep.subr.bf16.mxu0 %v1154
      %1250 = vmatpush1.bf16.msra.mxu0 %v1153
      %1251 = vmatprep.subr.bf16.mxu0 %v1156
      %1252 = vmatpush1.bf16.msra.mxu0 %v1155
      %1253 = vmatprep.subr.bf16.mxu0 %v1158
      %1254 = vmatpush1.bf16.msra.mxu0 %v1157
      %1255 = vmatprep.subr.bf16.mxu0 %v1160
      %1256 = vmatpush1.bf16.msra.mxu0 %v1159
      %1257 = vmatprep.subr.bf16.mxu0 %v1162
      %1258 = vmatpush1.bf16.msra.mxu0 %v1161
      %1259 = vmatprep.subr.bf16.mxu0 %v1164
      %1260 = vmatpush1.bf16.msra.mxu0 %v1163
      %1261 = vmatprep.subr.bf16.mxu0 %v1166
      %1262 = vmatpush1.bf16.msra.mxu0 %v1165
      %1263 = vmatprep.mubr.bf16.mxu0 %v923
      %1264 = vmatmul.mubr.bf16.gmra.mrb[0].mxu0 %v919
      %v1265 = vpop.f32.mrb[0].mxu0
      %v1266 = vadd.f32 %v984, %v1265
      %v1267 = vpop.f32.mrb[0].mxu0
      %v1268 = vadd.f32 %v988, %v1267
      %v1269 = vpop.f32.mrb[0].mxu0
      %v1270 = vadd.f32 %v984, %v1269
      %v1271 = vpop.f32.mrb[0].mxu0
      %v1272 = vadd.f32 %v988, %v1271
      %1273 = vmatprep.mubr.bf16.mxu0 %v924
      %1274 = vmatmul.mubr.bf16.gmra.mrb[0].mxu0 %v920
      %v1275 = vpop.f32.mrb[0].mxu0
      %v1276 = vadd.f32 %v984, %v1275
      %v1277 = vpop.f32.mrb[0].mxu0
      %v1278 = vadd.f32 %v988, %v1277
      %v1279 = vpop.f32.mrb[0].mxu0
      %v1280 = vadd.f32 %v984, %v1279
      %v1281 = vpop.f32.mrb[0].mxu0
      %v1282 = vadd.f32 %v988, %v1281
      %1283 = vmatprep.mubr.bf16.mxu0 %v925
      %1284 = vmatmul.mubr.bf16.gmra.mrb[0].mxu0 %v921
      %v1285 = vpop.f32.mrb[0].mxu0
      %v1286 = vadd.f32 %v984, %v1285
      %v1287 = vpop.f32.mrb[0].mxu0
      %v1288 = vadd.f32 %v988, %v1287
      %v1289 = vpop.f32.mrb[0].mxu0
      %v1290 = vadd.f32 %v984, %v1289
      %v1291 = vpop.f32.mrb[0].mxu0
      %v1292 = vadd.f32 %v988, %v1291
      %1293 = vmatprep.mubr.bf16.mxu0 %v926
      %1294 = vmatmul.mubr.bf16.gmra.mrb[0].mxu0 %v922
      %v1295 = vpop.f32.mrb[0].mxu0
      %v1296 = vadd.f32 %v984, %v1295
      %v1297 = vpop.f32.mrb[0].mxu0
      %v1298 = vadd.f32 %v988, %v1297
      %v1299 = vpop.f32.mrb[0].mxu0
      %v1300 = vadd.f32 %v984, %v1299
      %v1301 = vpop.f32.mrb[0].mxu0
      %v1302 = vadd.f32 %v988, %v1301
      %1303 = vdwg.mxu0
      %1304 = vmatprep.subr.bf16.mxu0 %v1168
      %1305 = vmatpush1.bf16.msra.mxu0 %v1167
      %1306 = vmatprep.subr.bf16.mxu0 %v1170
      %1307 = vmatpush1.bf16.msra.mxu0 %v1169
      %1308 = vmatprep.subr.bf16.mxu0 %v1172
      %1309 = vmatpush1.bf16.msra.mxu0 %v1171
      %1310 = vmatprep.subr.bf16.mxu0 %v1174
      %1311 = vmatpush1.bf16.msra.mxu0 %v1173
      %1312 = vmatprep.subr.bf16.mxu0 %v1176
      %1313 = vmatpush1.bf16.msra.mxu0 %v1175
      %1314 = vmatprep.subr.bf16.mxu0 %v1178
      %1315 = vmatpush1.bf16.msra.mxu0 %v1177
      %1316 = vmatprep.subr.bf16.mxu0 %v1180
      %1317 = vmatpush1.bf16.msra.mxu0 %v1179
      %1318 = vmatprep.subr.bf16.mxu0 %v1182
      %1319 = vmatpush1.bf16.msra.mxu0 %v1181
      %1320 = vmatprep.subr.bf16.mxu0 0
      %1321 = vmatpush1.bf16.msra.mxu0 0
      %1322 = vmatprep.subr.bf16.mxu0 0
      %1323 = vmatpush1.bf16.msra.mxu0 0
      %1324 = vmatprep.subr.bf16.mxu0 0
      %1325 = vmatpush1.bf16.msra.mxu0 0
      %1326 = vmatprep.subr.bf16.mxu0 0
      %1327 = vmatpush1.bf16.msra.mxu0 0
      %1328 = vmatprep.subr.bf16.mxu0 0
      %1329 = vmatpush1.bf16.msra.mxu0 0
      %1330 = vmatprep.subr.bf16.mxu0 0
      %1331 = vmatpush1.bf16.msra.mxu0 0
      %1332 = vmatprep.subr.bf16.mxu0 0
      %1333 = vmatpush1.bf16.msra.mxu0 0
      %1334 = vmatprep.subr.bf16.mxu0 0
      %1335 = vmatpush1.bf16.msra.mxu0 0
      %1336 = vmatprep.mubr.bf16.mxu0 0
      %1337 = vmatmul.mubr.bf16.gmra.mrb[0].mxu0 %v927
      %v1338 = vpop.f32.mrb[0].mxu0
      %v1339 = vadd.f32 %v1266, %v1338
      %v1340 = vpop.f32.mrb[0].mxu0
      %v1341 = vadd.f32 %v1268, %v1340
      %v1342 = vpop.f32.mrb[0].mxu0
      %v1343 = vadd.f32 %v1270, %v1342
      %v1344 = vpop.f32.mrb[0].mxu0
      %v1345 = vadd.f32 %v1272, %v1344
      %1346 = vmatprep.mubr.bf16.mxu0 0
      %1347 = vmatmul.mubr.bf16.gmra.mrb[0].mxu0 %v928
      %v1348 = vpop.f32.mrb[0].mxu0
      %v1349 = vadd.f32 %v1276, %v1348
      %v1350 = vpop.f32.mrb[0].mxu0
      %v1351 = vadd.f32 %v1278, %v1350
      %v1352 = vpop.f32.mrb[0].mxu0
      %v1353 = vadd.f32 %v1280, %v1352
      %v1354 = vpop.f32.mrb[0].mxu0
      %v1355 = vadd.f32 %v1282, %v1354
      %1356 = vmatprep.mubr.bf16.mxu0 0
      %1357 = vmatmul.mubr.bf16.gmra.mrb[0].mxu0 %v929
      %v1358 = vpop.f32.mrb[0].mxu0
      %v1359 = vadd.f32 %v1286, %v1358
      %v1360 = vpop.f32.mrb[0].mxu0
      %v1361 = vadd.f32 %v1288, %v1360
      %v1362 = vpop.f32.mrb[0].mxu0
      %v1363 = vadd.f32 %v1290, %v1362
      %v1364 = vpop.f32.mrb[0].mxu0
      %v1365 = vadd.f32 %v1292, %v1364
      %1366 = vmatprep.mubr.bf16.mxu0 0
      %1367 = vmatmul.mubr.bf16.gmra.mrb[0].mxu0 %v930
      %v1368 = vpop.f32.mrb[0].mxu0
      %v1369 = vadd.f32 %v1296, %v1368
      %v1370 = vpop.f32.mrb[0].mxu0
      %v1371 = vadd.f32 %v1298, %v1370
      %v1372 = vpop.f32.mrb[0].mxu0
      %v1373 = vadd.f32 %v1300, %v1372
      %v1374 = vpop.f32.mrb[0].mxu0
      %v1375 = vadd.f32 %v1302, %v1374
      %1376 = vdwg.mxu0
      %v1377 = vmax.f32 %v1339, 0.0
      %v1378 = vmax.f32 %v1341, 0.0
      %v1379 = vmax.f32 %v1343, 0.0
      %v1380 = vmax.f32 %v1345, 0.0
      %v1381 = vmax.f32 %v1349, 0.0
      %v1382 = vmax.f32 %v1351, 0.0
      %v1383 = vmax.f32 %v1353, 0.0
      %v1384 = vmax.f32 %v1355, 0.0
      %v1385 = vmax.f32 %v1359, 0.0
      %v1386 = vmax.f32 %v1361, 0.0
      %v1387 = vmax.f32 %v1363, 0.0
      %v1388 = vmax.f32 %v1365, 0.0
      %v1389 = vmax.f32 %v1369, 0.0
      %v1390 = vmax.f32 %v1371, 0.0
      %v1391 = vmax.f32 %v1373, 0.0
      %v1392 = vmax.f32 %v1375, 0.0
      %1393 = vst [vmem:[%s268] sm:$0xff] %v1377
      %1394 = vst [vmem:[%s268 + $0x8] sm:$0xff] %v1379
      %1395 = vst [vmem:[%s268 + $0x20] sm:$0xff] %v1381
      %1396 = vst [vmem:[%s268 + $0x28] sm:$0xff] %v1383
      %1397 = vst [vmem:[%s268 + $0x40] sm:$0xff] %v1385
      %1398 = vst [vmem:[%s268 + $0x48] sm:$0xff] %v1387
      %1399 = vst [vmem:[%s268 + $0x60] sm:$0xff] %v1389
      %1400 = vst [vmem:[%s268 + $0x68] sm:$0xff] %v1391
      %s1401 = scalar_lea.vmem %s268, 16
      %1402 = vst [vmem:[%s1401] sm:$0xff] %v1378
      %1403 = vst [vmem:[%s1401 + $0x8] sm:$0xff] %v1380
      %1404 = vst [vmem:[%s1401 + $0x20] sm:$0xff] %v1382
      %1405 = vst [vmem:[%s1401 + $0x28] sm:$0xff] %v1384
      %1406 = vst [vmem:[%s1401 + $0x40] sm:$0xff] %v1386
      %1407 = vst [vmem:[%s1401 + $0x48] sm:$0xff] %v1388
      %1408 = vst [vmem:[%s1401 + $0x60] sm:$0xff] %v1390
      %1409 = vst [vmem:[%s1401 + $0x68] sm:$0xff] %v1392
      %s1410 = smul.u32 4, %s21
      %p1411 = scmp.lt.s32.totalorder %s20, 1
      %s1412 = scalar_select %p1411, %s20, 1
      %p1413 = scmp.lt.s32.totalorder %s1410, 7
      %s1414 = scalar_select %p1413, %s1410, 7
      %s1415 = smul.addr %s1414, 4
      %s1416 = smul.addr %s1412, 32
      %s1417 = sadd.s32 %s1415, %s1416
      %s1418 = smul.addr %s1417, 8
      %s1419 = scalar_lea.vmem %s5, %s1418
      // Predicated region
      $region41: #{upsampling_forward.1} parent=39 // pred_check
        %p1420 = pneg %p163
      $region42: #{upsampling_forward.1} parent=39 // pred_check_branch
        %1422 = sbr.rel (%p1420) target = $region44
      $region43: #{upsampling_forward.1} parent=39 // pred_region
        %s1423 = smul.u32 4, %s21
      $region44: #{upsampling_forward.1} parent=39 // pred_fallthru
        _
    $region40: #{upsampling_forward.1} parent=5 // pred_fallthru
      _
    %p1424 = scmp.le.s32.totalorder 2, %s11
    // Predicated region
    $region45: #{upsampling_forward.1} parent=5 // pred_check
      %p1425 = pneg %p1424
    $region46: #{upsampling_forward.1} parent=5 // pred_check_branch
      %1427 = sbr.rel (%p1425) target = $region48
    $region47: #{upsampling_forward.1} parent=5 // pred_region
      %s1428 = ssub.s32 %s11, 2
      // Predicated region
      $region49: #{upsampling_forward.1} parent=47 // pred_check
        %p1429 = pneg %p169
      $region50: #{upsampling_forward.1} parent=47 // pred_check_branch
        %1431 = sbr.rel (%p1429) target = $region52
      $region51: #{upsampling_forward.1} parent=47 // pred_region
        %s1432 = smul.u32 4, %s23
        %p1433 = scmp.lt.s32.totalorder %s22, 1
        %s1434 = scalar_select %p1433, %s22, 1
        %p1435 = scmp.lt.s32.totalorder %s1432, 7
        %s1436 = scalar_select %p1435, %s1432, 7
        %s1437 = smul.addr %s1436, 4
        %s1438 = smul.addr %s1434, 32
        %s1439 = sadd.s32 %s1437, %s1438
        %s1440 = smul.addr %s1439, 8
        %s1441 = scalar_lea.vmem %s5, %s1440
      $region52: #{upsampling_forward.1} parent=47 // pred_fallthru
        _
    $region48: #{upsampling_forward.1} parent=5 // pred_fallthru
      _
  $region6: #{upsampling_forward.1} parent=0 // loop_footer
    %s15 = sadd.s32 1, %s11
  $region7: #{upsampling_forward.1} parent=0 // loop_footer_branch
    %10 = sbr.rel target = $region3
  $region8: #{upsampling_forward.1} parent=0 // loop_exit
    _

</llo_original>
